<compile_context>
chip_gen: v5e
topology: v5e:2x2
jax: 0.10.0
libtpu: 0.0.40
codegen_flags: <defaults>
</compile_context>

<pallas_src>
import math

import jax
import jax.numpy as jnp
from jax.experimental import pallas as pl
from jax.experimental.pallas import tpu as pltpu


def _gaussian_1d(ksize, sigma):
    """Matches torch `gaussian(window_size, sigma)` exactly (python floats)."""
    vals = [math.exp(-((x - ksize // 2) ** 2) / float(2 * sigma ** 2))
            for x in range(ksize)]
    s = sum(vals)
    return [v / s for v in vals]


def _round_up(a, b):
    return ((a + b - 1) // b) * b


def _choose_tile_c(NC, H, W, kh, kw, itemsize):
    """Pick the channel (lane) tile size and the padded channel count."""
    LANE = 128
    if NC <= LANE:
        return NC, NC                       # one full-extent block on the lane axis
    Hp, Wp = H + kh - 1, W + kw - 1
    # per-channel per-step VMEM bytes: double-buffered in+out + f32 scratches
    per_c = 4 * H * W * itemsize + (Hp * Wp + H * Wp) * 4
    budget = 12 * 1024 * 1024               # conservative: fits v7x's 64 MiB VMEM
    max_tc = max(LANE, (budget // per_c) // LANE * LANE)
    cpad_lane = _round_up(NC, LANE)
    # prefer >= 2 grid steps so v7x's two TensorCores both get work
    half = max(LANE, (cpad_lane // 2) // LANE * LANE)
    tile_c = int(min(max_tc, half, 8 * LANE))
    return tile_c, _round_up(NC, tile_c)


def _make_blur_kernel(H, W, kh, kw, wx, wy, ph, pw):
    """Pallas kernel body with static taps/weights baked in (separable)."""

    def blur_kernel(x_ref, o_ref, pad_ref, mid_ref):
        # x_ref / o_ref : (H, W, TC)         pad_ref : (Hp, Wp, TC) f32
        # mid_ref       : (H, Wp, TC) f32
        # Zero padding inside the kernel (same as F.conv2d zero padding).
        pad_ref[...] = jnp.zeros_like(pad_ref)
        pad_ref[ph:ph + H, pw:pw + W, :] = x_ref[...].astype(jnp.float32)

        # Vertical pass (kernel_size[0] along H): taps slide on the leading dim.
        acc = jnp.float32(wx[0]) * pad_ref[0:H, :, :]
        for i in range(1, kh):
            acc = acc + jnp.float32(wx[i]) * pad_ref[i:i + H, :, :]
        mid_ref[...] = acc

        # Horizontal pass (kernel_size[1] along W): taps slide on the sublane dim.
        out = jnp.float32(wy[0]) * mid_ref[:, 0:W, :]
        for j in range(1, kw):
            out = out + jnp.float32(wy[j]) * mid_ref[:, j:j + W, :]
        o_ref[...] = out.astype(o_ref.dtype)

    return blur_kernel


def gaussian_blur(x, kernel_size=5, sigma=1.5):
    """Equivalent of GaussianBlur(kernel_size, sigma)(x) for (B,C,H,W) / (C,H,W)."""
    if isinstance(kernel_size, int):
        kernel_size = (kernel_size, kernel_size)
    if isinstance(sigma, (int, float)):
        sigma = (float(sigma), float(sigma))
    kh, kw = kernel_size
    if kh <= 0 or kw <= 0 or kh % 2 == 0 or kw % 2 == 0:
        raise ValueError("ksize must be odd and positive (matches the torch module)")

    in_shape = x.shape
    if x.ndim == 3:
        x = x[None]
    assert x.ndim == 4, "expect BxCxHxW"
    B, C, H, W = x.shape
    NC = B * C
    ph, pw = (kh - 1) // 2, (kw - 1) // 2
    Hp, Wp = H + kh - 1, W + kw - 1

    # Separable weights: kernel_size[0]/sigma[0] act along H (conv2d weight
    # dim-2) and kernel_size[1]/sigma[1] along W — same as the torch module.
    wx = _gaussian_1d(kh, sigma[0])
    wy = _gaussian_1d(kw, sigma[1])

    tile_c, cpad = _choose_tile_c(NC, H, W, kh, kw, jnp.dtype(x.dtype).itemsize)

    # Channels-last internal layout: (H, W, N*C); channels on the lane axis.
    xcl = jnp.transpose(x.reshape(NC, H, W), (1, 2, 0))
    if cpad != NC:
        xcl = jnp.pad(xcl, ((0, 0), (0, 0), (0, cpad - NC)))

    kernel = _make_blur_kernel(H, W, kh, kw, wx, wy, ph, pw)

    out = pl.pallas_call(
        kernel,
        out_shape=jax.ShapeDtypeStruct((H, W, cpad), x.dtype),
        grid_spec=pltpu.PrefetchScalarGridSpec(
            num_scalar_prefetch=0,
            grid=(cpad // tile_c,),
            in_specs=[pl.BlockSpec((H, W, tile_c), lambda c: (0, 0, c))],
            out_specs=pl.BlockSpec((H, W, tile_c), lambda c: (0, 0, c)),
            scratch_shapes=[
                pltpu.VMEM((Hp, Wp, tile_c), jnp.float32),   # zero-padded input
                pltpu.VMEM((H, Wp, tile_c), jnp.float32),    # after vertical pass
            ],
        ),
        compiler_params=pltpu.CompilerParams(
            dimension_semantics=("parallel",),
            vmem_limit_bytes=32 * 1024 * 1024,
        ),
    )(xcl)

    out = jnp.transpose(out[:, :, :NC], (2, 0, 1))   # back to (N*C, H, W)
    return out.reshape(in_shape)


def _reference_blur(x, kernel_size, sigma):
    """Plain-JAX reference (zero-padded depthwise conv), for correctness check."""
    if isinstance(kernel_size, int):
        kernel_size = (kernel_size, kernel_size)
    if isinstance(sigma, (int, float)):
        sigma = (float(sigma), float(sigma))
    kh, kw = kernel_size
    ph, pw = (kh - 1) // 2, (kw - 1) // 2
    wx = jnp.asarray(_gaussian_1d(kh, sigma[0]), dtype=jnp.float32)
    wy = jnp.asarray(_gaussian_1d(kw, sigma[1]), dtype=jnp.float32)
    w2d = wx[:, None] * wy[None, :]
    B, C, H, W = x.shape
    xpad = jnp.pad(x.astype(jnp.float32), ((0, 0), (0, 0), (ph, ph), (pw, pw)))
    out = jnp.zeros((B, C, H, W), jnp.float32)
    for i in range(kh):
        for j in range(kw):
            out = out + w2d[i, j] * xpad[:, :, i:i + H, j:j + W]
    return out.astype(x.dtype)


if __name__ == "__main__":
    key = jax.random.PRNGKey(0)
    B, C, H, W = 2, 4, 16, 16
    x = jax.random.normal(key, (B, C, H, W), dtype=jnp.float32)

    # square kernel
    y = jax.block_until_ready(gaussian_blur(x, 5, 1.5))
    y_ref = _reference_blur(x, 5, 1.5)
    assert y.shape == x.shape
    assert jnp.allclose(y, y_ref, atol=1e-5, rtol=1e-5), "mismatch (square kernel)"

    # non-square kernel / sigma (exercises the kh != kw path)
    y2 = jax.block_until_ready(gaussian_blur(x, (5, 3), (1.5, 1.0)))
    y2_ref = _reference_blur(x, (5, 3), (1.5, 1.0))
    assert jnp.allclose(y2, y2_ref, atol=1e-5, rtol=1e-5), "mismatch (non-square kernel)"

    print("KERNEL_OK")
</pallas_src>

<mosaic_0001>
module attributes {stable_mosaic.version = 11 : i64} {
  func.func @blur_kernel(%arg0: i32, %arg1: memref<16x16x8xf32, #tpu.memory_space<vmem>>, %arg2: memref<16x16x8xf32, #tpu.memory_space<vmem>>, %arg3: memref<20x20x8xf32, #tpu.memory_space<vmem>>, %arg4: memref<16x20x8xf32, #tpu.memory_space<vmem>>) attributes {dimension_semantics = [#tpu.dimension_semantics<parallel>], iteration_bounds = array<i64: 1>, scalar_prefetch = 0 : i64, scratch_operands = 2 : i64, tpu.core_type = #tpu.core_type<tc>, window_params = [{transform_indices = @transform_0, window_bounds = array<i64: 16, 16, 8>}, {transform_indices = @transform_1, window_bounds = array<i64: 16, 16, 8>}]} {
    %cst = arith.constant 0.000000e+00 : f32
    %0 = vector.broadcast %cst : f32 to vector<20x20x8xf32>
    %c0 = arith.constant 0 : index
    %c0_0 = arith.constant 0 : index
    %c0_1 = arith.constant 0 : index
    %1 = vector.load %arg3[%c0, %c0_0, %c0_1] : memref<20x20x8xf32, #tpu.memory_space<vmem>>, vector<20x20x8xf32>
    tpu.vector_store %arg3[%c0, %c0_0, %c0_1], %0 {strides = array<i32>} : memref<20x20x8xf32, #tpu.memory_space<vmem>>, vector<20x20x8xf32>,
    %c0_2 = arith.constant 0 : index
    %c0_3 = arith.constant 0 : index
    %c0_4 = arith.constant 0 : index
    %2 = vector.load %arg1[%c0_2, %c0_3, %c0_4] : memref<16x16x8xf32, #tpu.memory_space<vmem>>, vector<16x16x8xf32>
    %c2 = arith.constant 2 : index
    %c2_5 = arith.constant 2 : index
    %c0_6 = arith.constant 0 : index
    %3 = vector.load %arg3[%c2, %c2_5, %c0_6] : memref<20x20x8xf32, #tpu.memory_space<vmem>>, vector<16x16x8xf32>
    tpu.vector_store %arg3[%c2, %c2_5, %c0_6], %2 {strides = array<i32>} : memref<20x20x8xf32, #tpu.memory_space<vmem>>, vector<16x16x8xf32>,
    %c0_7 = arith.constant 0 : index
    %c0_8 = arith.constant 0 : index
    %c0_9 = arith.constant 0 : index
    %4 = vector.load %arg3[%c0_7, %c0_8, %c0_9] : memref<20x20x8xf32, #tpu.memory_space<vmem>>, vector<16x20x8xf32>
    %cst_10 = arith.constant 0.120078385 : f32
    %5 = vector.broadcast %cst_10 : f32 to vector<16x20x8xf32>
    %6 = arith.mulf %5, %4 : vector<16x20x8xf32>
    %c1 = arith.constant 1 : index
    %c0_11 = arith.constant 0 : index
    %c0_12 = arith.constant 0 : index
    %7 = vector.load %arg3[%c1, %c0_11, %c0_12] : memref<20x20x8xf32, #tpu.memory_space<vmem>>, vector<16x20x8xf32>
    %cst_13 = arith.constant 0.233880758 : f32
    %8 = vector.broadcast %cst_13 : f32 to vector<16x20x8xf32>
    %9 = arith.mulf %8, %7 : vector<16x20x8xf32>
    %10 = arith.addf %6, %9 : vector<16x20x8xf32>
    %c2_14 = arith.constant 2 : index
    %c0_15 = arith.constant 0 : index
    %c0_16 = arith.constant 0 : index
    %11 = vector.load %arg3[%c2_14, %c0_15, %c0_16] : memref<20x20x8xf32, #tpu.memory_space<vmem>>, vector<16x20x8xf32>
    %cst_17 = arith.constant 0.292081714 : f32
    %12 = vector.broadcast %cst_17 : f32 to vector<16x20x8xf32>
    %13 = arith.mulf %12, %11 : vector<16x20x8xf32>
    %14 = arith.addf %10, %13 : vector<16x20x8xf32>
    %c3 = arith.constant 3 : index
    %c0_18 = arith.constant 0 : index
    %c0_19 = arith.constant 0 : index
    %15 = vector.load %arg3[%c3, %c0_18, %c0_19] : memref<20x20x8xf32, #tpu.memory_space<vmem>>, vector<16x20x8xf32>
    %cst_20 = arith.constant 0.233880758 : f32
    %16 = vector.broadcast %cst_20 : f32 to vector<16x20x8xf32>
    %17 = arith.mulf %16, %15 : vector<16x20x8xf32>
    %18 = arith.addf %14, %17 : vector<16x20x8xf32>
    %c4 = arith.constant 4 : index
    %c0_21 = arith.constant 0 : index
    %c0_22 = arith.constant 0 : index
    %19 = vector.load %arg3[%c4, %c0_21, %c0_22] : memref<20x20x8xf32, #tpu.memory_space<vmem>>, vector<16x20x8xf32>
    %cst_23 = arith.constant 0.120078385 : f32
    %20 = vector.broadcast %cst_23 : f32 to vector<16x20x8xf32>
    %21 = arith.mulf %20, %19 : vector<16x20x8xf32>
    %22 = arith.addf %18, %21 : vector<16x20x8xf32>
    %c0_24 = arith.constant 0 : index
    %c0_25 = arith.constant 0 : index
    %c0_26 = arith.constant 0 : index
    %23 = vector.load %arg4[%c0_24, %c0_25, %c0_26] : memref<16x20x8xf32, #tpu.memory_space<vmem>>, vector<16x20x8xf32>
    tpu.vector_store %arg4[%c0_24, %c0_25, %c0_26], %22 {strides = array<i32>} : memref<16x20x8xf32, #tpu.memory_space<vmem>>, vector<16x20x8xf32>,
    %c0_27 = arith.constant 0 : index
    %c0_28 = arith.constant 0 : index
    %c0_29 = arith.constant 0 : index
    %24 = vector.load %arg4[%c0_27, %c0_28, %c0_29] : memref<16x20x8xf32, #tpu.memory_space<vmem>>, vector<16x16x8xf32>
    %cst_30 = arith.constant 0.120078385 : f32
    %25 = vector.broadcast %cst_30 : f32 to vector<16x16x8xf32>
    %26 = arith.mulf %25, %24 : vector<16x16x8xf32>
    %c0_31 = arith.constant 0 : index
    %c1_32 = arith.constant 1 : index
    %c0_33 = arith.constant 0 : index
    %27 = vector.load %arg4[%c0_31, %c1_32, %c0_33] : memref<16x20x8xf32, #tpu.memory_space<vmem>>, vector<16x16x8xf32>
    %cst_34 = arith.constant 0.233880758 : f32
    %28 = vector.broadcast %cst_34 : f32 to vector<16x16x8xf32>
    %29 = arith.mulf %28, %27 : vector<16x16x8xf32>
    %30 = arith.addf %26, %29 : vector<16x16x8xf32>
    %c0_35 = arith.constant 0 : index
    %c2_36 = arith.constant 2 : index
    %c0_37 = arith.constant 0 : index
    %31 = vector.load %arg4[%c0_35, %c2_36, %c0_37] : memref<16x20x8xf32, #tpu.memory_space<vmem>>, vector<16x16x8xf32>
    %cst_38 = arith.constant 0.292081714 : f32
    %32 = vector.broadcast %cst_38 : f32 to vector<16x16x8xf32>
    %33 = arith.mulf %32, %31 : vector<16x16x8xf32>
    %34 = arith.addf %30, %33 : vector<16x16x8xf32>
    %c0_39 = arith.constant 0 : index
    %c3_40 = arith.constant 3 : index
    %c0_41 = arith.constant 0 : index
    %35 = vector.load %arg4[%c0_39, %c3_40, %c0_41] : memref<16x20x8xf32, #tpu.memory_space<vmem>>, vector<16x16x8xf32>
    %cst_42 = arith.constant 0.233880758 : f32
    %36 = vector.broadcast %cst_42 : f32 to vector<16x16x8xf32>
    %37 = arith.mulf %36, %35 : vector<16x16x8xf32>
    %38 = arith.addf %34, %37 : vector<16x16x8xf32>
    %c0_43 = arith.constant 0 : index
    %c4_44 = arith.constant 4 : index
    %c0_45 = arith.constant 0 : index
    %39 = vector.load %arg4[%c0_43, %c4_44, %c0_45] : memref<16x20x8xf32, #tpu.memory_space<vmem>>, vector<16x16x8xf32>
    %cst_46 = arith.constant 0.120078385 : f32
    %40 = vector.broadcast %cst_46 : f32 to vector<16x16x8xf32>
    %41 = arith.mulf %40, %39 : vector<16x16x8xf32>
    %42 = arith.addf %38, %41 : vector<16x16x8xf32>
    %c0_47 = arith.constant 0 : index
    %c0_48 = arith.constant 0 : index
    %c0_49 = arith.constant 0 : index
    %43 = vector.load %arg2[%c0_47, %c0_48, %c0_49] : memref<16x16x8xf32, #tpu.memory_space<vmem>>, vector<16x16x8xf32>
    tpu.vector_store %arg2[%c0_47, %c0_48, %c0_49], %42 {strides = array<i32>} : memref<16x16x8xf32, #tpu.memory_space<vmem>>, vector<16x16x8xf32>,
    return
  }
  func.func @transform_0(%arg0: i32) -> (i32, i32, i32) {
    %c0_i32 = arith.constant 0 : i32
    %c0_i32_0 = arith.constant 0 : i32
    %c0_i32_1 = arith.constant 0 : i32
    return %c0_i32, %c0_i32_0, %arg0 : i32, i32, i32
  }
  func.func @transform_1(%arg0: i32) -> (i32, i32, i32) {
    %c0_i32 = arith.constant 0 : i32
    %c0_i32_0 = arith.constant 0 : i32
    %c0_i32_1 = arith.constant 0 : i32
    return %c0_i32, %c0_i32_0, %arg0 : i32, i32, i32
  }
}

</mosaic_0001>

<llo_original>
// kernel: tpu_custom_call.1
$region0: #{tpu_custom_call.1}
  #allocation0 [shape = 'u32[]', space=smem, size = 0x4, offset = 0x4, fixed_abs, tag = 'smem constant byte address 0x4 - core index']
  #allocation1 [shape = 'u32[72,128]{1,0:T(1,128)}', space=vmem, size = 0x9000, scoped, tag = 'internal scratch']
  #allocation2 [shape = 'f32[20,20,8]{2,1,0:T(8,128)}', space=vmem, size = 0x3c000, scoped, tag = 'scratch operand']
  #allocation3 [shape = 'f32[16,20,8]{2,1,0:T(8,128)}', space=vmem, size = 0x30000, scoped, tag = 'scratch operand']
  %s0 = inlined_call_operand.vmem [shape: f32[16,16,8], index: 0, kind: input, shape index: {}]
  %s1 = inlined_call_operand.vmem [shape: f32[16,16,8], index: 1, kind: output, shape index: {}]
  %s2 = sld [smem:[#allocation0]]
  $region14: #{tpu_custom_call.1} parent=0
    _
  %s4 = ssub.s32 1, %s2
  %s5 = scalar_select 0, %s4, %s2
  // Predicated region
  $region2: #{tpu_custom_call.1} parent=0 // pred_check
    _
  $region3: #{tpu_custom_call.1} parent=0 // pred_check_branch
    %7 = sbr.rel (0) target = $region5
  $region4: #{tpu_custom_call.1} parent=0 // pred_region
    _
  $region5: #{tpu_custom_call.1} parent=0 // pred_fallthru
    _
  %vm8 = vcmask 64512
  %9 = vst.msk [vmem:[#allocation2] sm:$0xff] %vm8, 0.0
  %10 = vst.msk [vmem:[#allocation2 + $0x8] sm:$0xff] %vm8, 0.0
  %vm11 = vcmask 60416
  %12 = vst.msk [vmem:[#allocation2 + $0x10] sm:$0xf] %vm11, 0.0
  %13 = vst.msk [vmem:[#allocation2 + $0x18] sm:$0xff] %vm8, 0.0
  %14 = vst.msk [vmem:[#allocation2 + $0x20] sm:$0xff] %vm8, 0.0
  %15 = vst.msk [vmem:[#allocation2 + $0x28] sm:$0xf] %vm11, 0.0
  %16 = vst.msk [vmem:[#allocation2 + $0x30] sm:$0xff] %vm8, 0.0
  %17 = vst.msk [vmem:[#allocation2 + $0x38] sm:$0xff] %vm8, 0.0
  %18 = vst.msk [vmem:[#allocation2 + $0x40] sm:$0xf] %vm11, 0.0
  %19 = vst.msk [vmem:[#allocation2 + $0x48] sm:$0xff] %vm8, 0.0
  %20 = vst.msk [vmem:[#allocation2 + $0x50] sm:$0xff] %vm8, 0.0
  %21 = vst.msk [vmem:[#allocation2 + $0x58] sm:$0xf] %vm11, 0.0
  %22 = vst.msk [vmem:[#allocation2 + $0x60] sm:$0xff] %vm8, 0.0
  %23 = vst.msk [vmem:[#allocation2 + $0x68] sm:$0xff] %vm8, 0.0
  %24 = vst.msk [vmem:[#allocation2 + $0x70] sm:$0xf] %vm11, 0.0
  %25 = vst.msk [vmem:[#allocation2 + $0x78] sm:$0xff] %vm8, 0.0
  %26 = vst.msk [vmem:[#allocation2 + $0x80] sm:$0xff] %vm8, 0.0
  %27 = vst.msk [vmem:[#allocation2 + $0x88] sm:$0xf] %vm11, 0.0
  %28 = vst.msk [vmem:[#allocation2 + $0x90] sm:$0xff] %vm8, 0.0
  %29 = vst.msk [vmem:[#allocation2 + $0x98] sm:$0xff] %vm8, 0.0
  %30 = vst.msk [vmem:[#allocation2 + $0xa0] sm:$0xf] %vm11, 0.0
  %31 = vst.msk [vmem:[#allocation2 + $0xa8] sm:$0xff] %vm8, 0.0
  %32 = vst.msk [vmem:[#allocation2 + $0xb0] sm:$0xff] %vm8, 0.0
  %33 = vst.msk [vmem:[#allocation2 + $0xb8] sm:$0xf] %vm11, 0.0
  %34 = vst.msk [vmem:[#allocation2 + $0xc0] sm:$0xff] %vm8, 0.0
  %35 = vst.msk [vmem:[#allocation2 + $0xc8] sm:$0xff] %vm8, 0.0
  %36 = vst.msk [vmem:[#allocation2 + $0xd0] sm:$0xf] %vm11, 0.0
  %37 = vst.msk [vmem:[#allocation2 + $0xd8] sm:$0xff] %vm8, 0.0
  %38 = vst.msk [vmem:[#allocation2 + $0xe0] sm:$0xff] %vm8, 0.0
  %39 = vst.msk [vmem:[#allocation2 + $0xe8] sm:$0xf] %vm11, 0.0
  %40 = vst.msk [vmem:[#allocation2 + $0xf0] sm:$0xff] %vm8, 0.0
  %41 = vst.msk [vmem:[#allocation2 + $0xf8] sm:$0xff] %vm8, 0.0
  %42 = vst.msk [vmem:[#allocation2 + $0x100] sm:$0xf] %vm11, 0.0
  %43 = vst.msk [vmem:[#allocation2 + $0x108] sm:$0xff] %vm8, 0.0
  %44 = vst.msk [vmem:[#allocation2 + $0x110] sm:$0xff] %vm8, 0.0
  %45 = vst.msk [vmem:[#allocation2 + $0x118] sm:$0xf] %vm11, 0.0
  %46 = vst.msk [vmem:[#allocation2 + $0x120] sm:$0xff] %vm8, 0.0
  %47 = vst.msk [vmem:[#allocation2 + $0x128] sm:$0xff] %vm8, 0.0
  %48 = vst.msk [vmem:[#allocation2 + $0x130] sm:$0xf] %vm11, 0.0
  %49 = vst.msk [vmem:[#allocation2 + $0x138] sm:$0xff] %vm8, 0.0
  %50 = vst.msk [vmem:[#allocation2 + $0x140] sm:$0xff] %vm8, 0.0
  %51 = vst.msk [vmem:[#allocation2 + $0x148] sm:$0xf] %vm11, 0.0
  %52 = vst.msk [vmem:[#allocation2 + $0x150] sm:$0xff] %vm8, 0.0
  %53 = vst.msk [vmem:[#allocation2 + $0x158] sm:$0xff] %vm8, 0.0
  %54 = vst.msk [vmem:[#allocation2 + $0x160] sm:$0xf] %vm11, 0.0
  %55 = vst.msk [vmem:[#allocation2 + $0x168] sm:$0xff] %vm8, 0.0
  %56 = vst.msk [vmem:[#allocation2 + $0x170] sm:$0xff] %vm8, 0.0
  %57 = vst.msk [vmem:[#allocation2 + $0x178] sm:$0xf] %vm11, 0.0
  %58 = vst.msk [vmem:[#allocation2 + $0x180] sm:$0xff] %vm8, 0.0
  %59 = vst.msk [vmem:[#allocation2 + $0x188] sm:$0xff] %vm8, 0.0
  %60 = vst.msk [vmem:[#allocation2 + $0x190] sm:$0xf] %vm11, 0.0
  %61 = vst.msk [vmem:[#allocation2 + $0x198] sm:$0xff] %vm8, 0.0
  %62 = vst.msk [vmem:[#allocation2 + $0x1a0] sm:$0xff] %vm8, 0.0
  %63 = vst.msk [vmem:[#allocation2 + $0x1a8] sm:$0xf] %vm11, 0.0
  %64 = vst.msk [vmem:[#allocation2 + $0x1b0] sm:$0xff] %vm8, 0.0
  %65 = vst.msk [vmem:[#allocation2 + $0x1b8] sm:$0xff] %vm8, 0.0
  %66 = vst.msk [vmem:[#allocation2 + $0x1c0] sm:$0xf] %vm11, 0.0
  %67 = vst.msk [vmem:[#allocation2 + $0x1c8] sm:$0xff] %vm8, 0.0
  %68 = vst.msk [vmem:[#allocation2 + $0x1d0] sm:$0xff] %vm8, 0.0
  %69 = vst.msk [vmem:[#allocation2 + $0x1d8] sm:$0xf] %vm11, 0.0
  %v70 = vld [vmem:[%s0] sm:$0xff]
  %v71 = vld [vmem:[%s0 + $0x8] sm:$0xff]
  %v72 = vld [vmem:[%s0 + $0x10] sm:$0xff]
  %v73 = vld [vmem:[%s0 + $0x18] sm:$0xff]
  %v74 = vld [vmem:[%s0 + $0x20] sm:$0xff]
  %v75 = vld [vmem:[%s0 + $0x28] sm:$0xff]
  %v76 = vld [vmem:[%s0 + $0x30] sm:$0xff]
  %v77 = vld [vmem:[%s0 + $0x38] sm:$0xff]
  %v78 = vld [vmem:[%s0 + $0x40] sm:$0xff]
  %v79 = vld [vmem:[%s0 + $0x48] sm:$0xff]
  %v80 = vld [vmem:[%s0 + $0x50] sm:$0xff]
  %v81 = vld [vmem:[%s0 + $0x58] sm:$0xff]
  %v82 = vld [vmem:[%s0 + $0x60] sm:$0xff]
  %v83 = vld [vmem:[%s0 + $0x68] sm:$0xff]
  %v84 = vld [vmem:[%s0 + $0x70] sm:$0xff]
  %v85 = vld [vmem:[%s0 + $0x78] sm:$0xff]
  %v86 = vld [vmem:[%s0 + $0x80] sm:$0xff]
  %v87 = vld [vmem:[%s0 + $0x88] sm:$0xff]
  %v88 = vld [vmem:[%s0 + $0x90] sm:$0xff]
  %v89 = vld [vmem:[%s0 + $0x98] sm:$0xff]
  %v90 = vld [vmem:[%s0 + $0xa0] sm:$0xff]
  %v91 = vld [vmem:[%s0 + $0xa8] sm:$0xff]
  %v92 = vld [vmem:[%s0 + $0xb0] sm:$0xff]
  %v93 = vld [vmem:[%s0 + $0xb8] sm:$0xff]
  %v94 = vld [vmem:[%s0 + $0xc0] sm:$0xff]
  %v95 = vld [vmem:[%s0 + $0xc8] sm:$0xff]
  %v96 = vld [vmem:[%s0 + $0xd0] sm:$0xff]
  %v97 = vld [vmem:[%s0 + $0xd8] sm:$0xff]
  %v98 = vld [vmem:[%s0 + $0xe0] sm:$0xff]
  %v99 = vld [vmem:[%s0 + $0xe8] sm:$0xff]
  %v100 = vld [vmem:[%s0 + $0xf0] sm:$0xff]
  %v101 = vld [vmem:[%s0 + $0xf8] sm:$0xff]
  %s102 = scalar_lea.vmem [#allocation2], 48
  %103 = vst.msk [vmem:[%s102 + $0x2] sm:$0xff] %vm8, %v70
  %104 = vst.msk [vmem:[%s102 + $0xa] sm:$0xff] %vm8, %v71
  %105 = vst.msk [vmem:[%s102 + $0x1a] sm:$0xff] %vm8, %v72
  %106 = vst.msk [vmem:[%s102 + $0x22] sm:$0xff] %vm8, %v73
  %107 = vst.msk [vmem:[%s102 + $0x32] sm:$0xff] %vm8, %v74
  %108 = vst.msk [vmem:[%s102 + $0x3a] sm:$0xff] %vm8, %v75
  %109 = vst.msk [vmem:[%s102 + $0x4a] sm:$0xff] %vm8, %v76
  %110 = vst.msk [vmem:[%s102 + $0x52] sm:$0xff] %vm8, %v77
  %111 = vst.msk [vmem:[%s102 + $0x62] sm:$0xff] %vm8, %v78
  %112 = vst.msk [vmem:[%s102 + $0x6a] sm:$0xff] %vm8, %v79
  %113 = vst.msk [vmem:[%s102 + $0x7a] sm:$0xff] %vm8, %v80
  %114 = vst.msk [vmem:[%s102 + $0x82] sm:$0xff] %vm8, %v81
  %115 = vst.msk [vmem:[%s102 + $0x92] sm:$0xff] %vm8, %v82
  %116 = vst.msk [vmem:[%s102 + $0x9a] sm:$0xff] %vm8, %v83
  %117 = vst.msk [vmem:[%s102 + $0xaa] sm:$0xff] %vm8, %v84
  %118 = vst.msk [vmem:[%s102 + $0xb2] sm:$0xff] %vm8, %v85
  %119 = vst.msk [vmem:[%s102 + $0xc2] sm:$0xff] %vm8, %v86
  %120 = vst.msk [vmem:[%s102 + $0xca] sm:$0xff] %vm8, %v87
  %121 = vst.msk [vmem:[%s102 + $0xda] sm:$0xff] %vm8, %v88
  %122 = vst.msk [vmem:[%s102 + $0xe2] sm:$0xff] %vm8, %v89
  %123 = vst.msk [vmem:[%s102 + $0xf2] sm:$0xff] %vm8, %v90
  %124 = vst.msk [vmem:[%s102 + $0xfa] sm:$0xff] %vm8, %v91
  %125 = vst.msk [vmem:[%s102 + $0x10a] sm:$0xff] %vm8, %v92
  %126 = vst.msk [vmem:[%s102 + $0x112] sm:$0xff] %vm8, %v93
  %127 = vst.msk [vmem:[%s102 + $0x122] sm:$0xff] %vm8, %v94
  %128 = vst.msk [vmem:[%s102 + $0x12a] sm:$0xff] %vm8, %v95
  %129 = vst.msk [vmem:[%s102 + $0x13a] sm:$0xff] %vm8, %v96
  %130 = vst.msk [vmem:[%s102 + $0x142] sm:$0xff] %vm8, %v97
  %131 = vst.msk [vmem:[%s102 + $0x152] sm:$0xff] %vm8, %v98
  %132 = vst.msk [vmem:[%s102 + $0x15a] sm:$0xff] %vm8, %v99
  %133 = vst.msk [vmem:[%s102 + $0x16a] sm:$0xff] %vm8, %v100
  %134 = vst.msk [vmem:[%s102 + $0x172] sm:$0xff] %vm8, %v101
  %v135 = vld [vmem:[#allocation2] sm:$0xff]
  %v136 = vld [vmem:[#allocation2 + $0x8] sm:$0xff]
  %v137 = vld [vmem:[#allocation2 + $0x10] sm:$0xf]
  %v138 = vld [vmem:[#allocation2 + $0x18] sm:$0xff]
  %v139 = vld [vmem:[#allocation2 + $0x20] sm:$0xff]
  %v140 = vld [vmem:[#allocation2 + $0x28] sm:$0xf]
  %v141 = vld [vmem:[#allocation2 + $0x30] sm:$0xff]
  %v142 = vld [vmem:[#allocation2 + $0x38] sm:$0xff]
  %v143 = vld [vmem:[#allocation2 + $0x40] sm:$0xf]
  %v144 = vld [vmem:[#allocation2 + $0x48] sm:$0xff]
  %v145 = vld [vmem:[#allocation2 + $0x50] sm:$0xff]
  %v146 = vld [vmem:[#allocation2 + $0x58] sm:$0xf]
  %v147 = vld [vmem:[#allocation2 + $0x60] sm:$0xff]
  %v148 = vld [vmem:[#allocation2 + $0x68] sm:$0xff]
  %v149 = vld [vmem:[#allocation2 + $0x70] sm:$0xf]
  %v150 = vld [vmem:[#allocation2 + $0x78] sm:$0xff]
  %v151 = vld [vmem:[#allocation2 + $0x80] sm:$0xff]
  %v152 = vld [vmem:[#allocation2 + $0x88] sm:$0xf]
  %v153 = vld [vmem:[#allocation2 + $0x90] sm:$0xff]
  %v154 = vld [vmem:[#allocation2 + $0x98] sm:$0xff]
  %v155 = vld [vmem:[#allocation2 + $0xa0] sm:$0xf]
  %v156 = vld [vmem:[#allocation2 + $0xa8] sm:$0xff]
  %v157 = vld [vmem:[#allocation2 + $0xb0] sm:$0xff]
  %v158 = vld [vmem:[#allocation2 + $0xb8] sm:$0xf]
  %v159 = vld [vmem:[#allocation2 + $0xc0] sm:$0xff]
  %v160 = vld [vmem:[#allocation2 + $0xc8] sm:$0xff]
  %v161 = vld [vmem:[#allocation2 + $0xd0] sm:$0xf]
  %v162 = vld [vmem:[#allocation2 + $0xd8] sm:$0xff]
  %v163 = vld [vmem:[#allocation2 + $0xe0] sm:$0xff]
  %v164 = vld [vmem:[#allocation2 + $0xe8] sm:$0xf]
  %v165 = vld [vmem:[#allocation2 + $0xf0] sm:$0xff]
  %v166 = vld [vmem:[#allocation2 + $0xf8] sm:$0xff]
  %v167 = vld [vmem:[#allocation2 + $0x100] sm:$0xf]
  %v168 = vld [vmem:[#allocation2 + $0x108] sm:$0xff]
  %v169 = vld [vmem:[#allocation2 + $0x110] sm:$0xff]
  %v170 = vld [vmem:[#allocation2 + $0x118] sm:$0xf]
  %v171 = vld [vmem:[#allocation2 + $0x120] sm:$0xff]
  %v172 = vld [vmem:[#allocation2 + $0x128] sm:$0xff]
  %v173 = vld [vmem:[#allocation2 + $0x130] sm:$0xf]
  %v174 = vld [vmem:[#allocation2 + $0x138] sm:$0xff]
  %v175 = vld [vmem:[#allocation2 + $0x140] sm:$0xff]
  %v176 = vld [vmem:[#allocation2 + $0x148] sm:$0xf]
  %v177 = vld [vmem:[#allocation2 + $0x150] sm:$0xff]
  %v178 = vld [vmem:[#allocation2 + $0x158] sm:$0xff]
  %v179 = vld [vmem:[#allocation2 + $0x160] sm:$0xf]
  %v180 = vld [vmem:[#allocation2 + $0x168] sm:$0xff]
  %v181 = vld [vmem:[#allocation2 + $0x170] sm:$0xff]
  %v182 = vld [vmem:[#allocation2 + $0x178] sm:$0xf]
  %v183 = vmul.f32 %v135, 0.120078385
  %v184 = vmul.f32 %v136, 0.120078385
  %v185 = vmul.f32 %v137, 0.120078385
  %v186 = vmul.f32 %v138, 0.120078385
  %v187 = vmul.f32 %v139, 0.120078385
  %v188 = vmul.f32 %v140, 0.120078385
  %v189 = vmul.f32 %v141, 0.120078385
  %v190 = vmul.f32 %v142, 0.120078385
  %v191 = vmul.f32 %v143, 0.120078385
  %v192 = vmul.f32 %v144, 0.120078385
  %v193 = vmul.f32 %v145, 0.120078385
  %v194 = vmul.f32 %v146, 0.120078385
  %v195 = vmul.f32 %v147, 0.120078385
  %v196 = vmul.f32 %v148, 0.120078385
  %v197 = vmul.f32 %v149, 0.120078385
  %v198 = vmul.f32 %v150, 0.120078385
  %v199 = vmul.f32 %v151, 0.120078385
  %v200 = vmul.f32 %v152, 0.120078385
  %v201 = vmul.f32 %v153, 0.120078385
  %v202 = vmul.f32 %v154, 0.120078385
  %v203 = vmul.f32 %v155, 0.120078385
  %v204 = vmul.f32 %v156, 0.120078385
  %v205 = vmul.f32 %v157, 0.120078385
  %v206 = vmul.f32 %v158, 0.120078385
  %v207 = vmul.f32 %v159, 0.120078385
  %v208 = vmul.f32 %v160, 0.120078385
  %v209 = vmul.f32 %v161, 0.120078385
  %v210 = vmul.f32 %v162, 0.120078385
  %v211 = vmul.f32 %v163, 0.120078385
  %v212 = vmul.f32 %v164, 0.120078385
  %v213 = vmul.f32 %v165, 0.120078385
  %v214 = vmul.f32 %v166, 0.120078385
  %v215 = vmul.f32 %v167, 0.120078385
  %v216 = vmul.f32 %v168, 0.120078385
  %v217 = vmul.f32 %v169, 0.120078385
  %v218 = vmul.f32 %v170, 0.120078385
  %v219 = vmul.f32 %v171, 0.120078385
  %v220 = vmul.f32 %v172, 0.120078385
  %v221 = vmul.f32 %v173, 0.120078385
  %v222 = vmul.f32 %v174, 0.120078385
  %v223 = vmul.f32 %v175, 0.120078385
  %v224 = vmul.f32 %v176, 0.120078385
  %v225 = vmul.f32 %v177, 0.120078385
  %v226 = vmul.f32 %v178, 0.120078385
  %v227 = vmul.f32 %v179, 0.120078385
  %v228 = vmul.f32 %v180, 0.120078385
  %v229 = vmul.f32 %v181, 0.120078385
  %v230 = vmul.f32 %v182, 0.120078385
  %s231 = scalar_lea.vmem [#allocation2], 24
  %v232 = vld [vmem:[%s231] sm:$0xff]
  %v233 = vld [vmem:[%s231 + $0x8] sm:$0xff]
  %v234 = vld [vmem:[%s231 + $0x10] sm:$0xf]
  %v235 = vld [vmem:[%s231 + $0x18] sm:$0xff]
  %v236 = vld [vmem:[%s231 + $0x20] sm:$0xff]
  %v237 = vld [vmem:[%s231 + $0x28] sm:$0xf]
  %v238 = vld [vmem:[%s231 + $0x30] sm:$0xff]
  %v239 = vld [vmem:[%s231 + $0x38] sm:$0xff]
  %v240 = vld [vmem:[%s231 + $0x40] sm:$0xf]
  %v241 = vld [vmem:[%s231 + $0x48] sm:$0xff]
  %v242 = vld [vmem:[%s231 + $0x50] sm:$0xff]
  %v243 = vld [vmem:[%s231 + $0x58] sm:$0xf]
  %v244 = vld [vmem:[%s231 + $0x60] sm:$0xff]
  %v245 = vld [vmem:[%s231 + $0x68] sm:$0xff]
  %v246 = vld [vmem:[%s231 + $0x70] sm:$0xf]
  %v247 = vld [vmem:[%s231 + $0x78] sm:$0xff]
  %v248 = vld [vmem:[%s231 + $0x80] sm:$0xff]
  %v249 = vld [vmem:[%s231 + $0x88] sm:$0xf]
  %v250 = vld [vmem:[%s231 + $0x90] sm:$0xff]
  %v251 = vld [vmem:[%s231 + $0x98] sm:$0xff]
  %v252 = vld [vmem:[%s231 + $0xa0] sm:$0xf]
  %v253 = vld [vmem:[%s231 + $0xa8] sm:$0xff]
  %v254 = vld [vmem:[%s231 + $0xb0] sm:$0xff]
  %v255 = vld [vmem:[%s231 + $0xb8] sm:$0xf]
  %v256 = vld [vmem:[%s231 + $0xc0] sm:$0xff]
  %v257 = vld [vmem:[%s231 + $0xc8] sm:$0xff]
  %v258 = vld [vmem:[%s231 + $0xd0] sm:$0xf]
  %v259 = vld [vmem:[%s231 + $0xd8] sm:$0xff]
  %v260 = vld [vmem:[%s231 + $0xe0] sm:$0xff]
  %v261 = vld [vmem:[%s231 + $0xe8] sm:$0xf]
  %v262 = vld [vmem:[%s231 + $0xf0] sm:$0xff]
  %v263 = vld [vmem:[%s231 + $0xf8] sm:$0xff]
  %v264 = vld [vmem:[%s231 + $0x100] sm:$0xf]
  %v265 = vld [vmem:[%s231 + $0x108] sm:$0xff]
  %v266 = vld [vmem:[%s231 + $0x110] sm:$0xff]
  %v267 = vld [vmem:[%s231 + $0x118] sm:$0xf]
  %v268 = vld [vmem:[%s231 + $0x120] sm:$0xff]
  %v269 = vld [vmem:[%s231 + $0x128] sm:$0xff]
  %v270 = vld [vmem:[%s231 + $0x130] sm:$0xf]
  %v271 = vld [vmem:[%s231 + $0x138] sm:$0xff]
  %v272 = vld [vmem:[%s231 + $0x140] sm:$0xff]
  %v273 = vld [vmem:[%s231 + $0x148] sm:$0xf]
  %v274 = vld [vmem:[%s231 + $0x150] sm:$0xff]
  %v275 = vld [vmem:[%s231 + $0x158] sm:$0xff]
  %v276 = vld [vmem:[%s231 + $0x160] sm:$0xf]
  %v277 = vld [vmem:[%s231 + $0x168] sm:$0xff]
  %v278 = vld [vmem:[%s231 + $0x170] sm:$0xff]
  %v279 = vld [vmem:[%s231 + $0x178] sm:$0xf]
  %v280 = vmul.f32 %v232, 0.23388076
  %v281 = vmul.f32 %v233, 0.23388076
  %v282 = vmul.f32 %v234, 0.23388076
  %v283 = vmul.f32 %v235, 0.23388076
  %v284 = vmul.f32 %v236, 0.23388076
  %v285 = vmul.f32 %v237, 0.23388076
  %v286 = vmul.f32 %v238, 0.23388076
  %v287 = vmul.f32 %v239, 0.23388076
  %v288 = vmul.f32 %v240, 0.23388076
  %v289 = vmul.f32 %v241, 0.23388076
  %v290 = vmul.f32 %v242, 0.23388076
  %v291 = vmul.f32 %v243, 0.23388076
  %v292 = vmul.f32 %v244, 0.23388076
  %v293 = vmul.f32 %v245, 0.23388076
  %v294 = vmul.f32 %v246, 0.23388076
  %v295 = vmul.f32 %v247, 0.23388076
  %v296 = vmul.f32 %v248, 0.23388076
  %v297 = vmul.f32 %v249, 0.23388076
  %v298 = vmul.f32 %v250, 0.23388076
  %v299 = vmul.f32 %v251, 0.23388076
  %v300 = vmul.f32 %v252, 0.23388076
  %v301 = vmul.f32 %v253, 0.23388076
  %v302 = vmul.f32 %v254, 0.23388076
  %v303 = vmul.f32 %v255, 0.23388076
  %v304 = vmul.f32 %v256, 0.23388076
  %v305 = vmul.f32 %v257, 0.23388076
  %v306 = vmul.f32 %v258, 0.23388076
  %v307 = vmul.f32 %v259, 0.23388076
  %v308 = vmul.f32 %v260, 0.23388076
  %v309 = vmul.f32 %v261, 0.23388076
  %v310 = vmul.f32 %v262, 0.23388076
  %v311 = vmul.f32 %v263, 0.23388076
  %v312 = vmul.f32 %v264, 0.23388076
  %v313 = vmul.f32 %v265, 0.23388076
  %v314 = vmul.f32 %v266, 0.23388076
  %v315 = vmul.f32 %v267, 0.23388076
  %v316 = vmul.f32 %v268, 0.23388076
  %v317 = vmul.f32 %v269, 0.23388076
  %v318 = vmul.f32 %v270, 0.23388076
  %v319 = vmul.f32 %v271, 0.23388076
  %v320 = vmul.f32 %v272, 0.23388076
  %v321 = vmul.f32 %v273, 0.23388076
  %v322 = vmul.f32 %v274, 0.23388076
  %v323 = vmul.f32 %v275, 0.23388076
  %v324 = vmul.f32 %v276, 0.23388076
  %v325 = vmul.f32 %v277, 0.23388076
  %v326 = vmul.f32 %v278, 0.23388076
  %v327 = vmul.f32 %v279, 0.23388076
  %v328 = vadd.f32 %v183, %v280
  %v329 = vadd.f32 %v184, %v281
  %v330 = vadd.f32 %v185, %v282
  %v331 = vadd.f32 %v186, %v283
  %v332 = vadd.f32 %v187, %v284
  %v333 = vadd.f32 %v188, %v285
  %v334 = vadd.f32 %v189, %v286
  %v335 = vadd.f32 %v190, %v287
  %v336 = vadd.f32 %v191, %v288
  %v337 = vadd.f32 %v192, %v289
  %v338 = vadd.f32 %v193, %v290
  %v339 = vadd.f32 %v194, %v291
  %v340 = vadd.f32 %v195, %v292
  %v341 = vadd.f32 %v196, %v293
  %v342 = vadd.f32 %v197, %v294
  %v343 = vadd.f32 %v198, %v295
  %v344 = vadd.f32 %v199, %v296
  %v345 = vadd.f32 %v200, %v297
  %v346 = vadd.f32 %v201, %v298
  %v347 = vadd.f32 %v202, %v299
  %v348 = vadd.f32 %v203, %v300
  %v349 = vadd.f32 %v204, %v301
  %v350 = vadd.f32 %v205, %v302
  %v351 = vadd.f32 %v206, %v303
  %v352 = vadd.f32 %v207, %v304
  %v353 = vadd.f32 %v208, %v305
  %v354 = vadd.f32 %v209, %v306
  %v355 = vadd.f32 %v210, %v307
  %v356 = vadd.f32 %v211, %v308
  %v357 = vadd.f32 %v212, %v309
  %v358 = vadd.f32 %v213, %v310
  %v359 = vadd.f32 %v214, %v311
  %v360 = vadd.f32 %v215, %v312
  %v361 = vadd.f32 %v216, %v313
  %v362 = vadd.f32 %v217, %v314
  %v363 = vadd.f32 %v218, %v315
  %v364 = vadd.f32 %v219, %v316
  %v365 = vadd.f32 %v220, %v317
  %v366 = vadd.f32 %v221, %v318
  %v367 = vadd.f32 %v222, %v319
  %v368 = vadd.f32 %v223, %v320
  %v369 = vadd.f32 %v224, %v321
  %v370 = vadd.f32 %v225, %v322
  %v371 = vadd.f32 %v226, %v323
  %v372 = vadd.f32 %v227, %v324
  %v373 = vadd.f32 %v228, %v325
  %v374 = vadd.f32 %v229, %v326
  %v375 = vadd.f32 %v230, %v327
  %v376 = vld [vmem:[%s102] sm:$0xff]
  %v377 = vld [vmem:[%s102 + $0x8] sm:$0xff]
  %v378 = vld [vmem:[%s102 + $0x10] sm:$0xf]
  %v379 = vld [vmem:[%s102 + $0x18] sm:$0xff]
  %v380 = vld [vmem:[%s102 + $0x20] sm:$0xff]
  %v381 = vld [vmem:[%s102 + $0x28] sm:$0xf]
  %v382 = vld [vmem:[%s102 + $0x30] sm:$0xff]
  %v383 = vld [vmem:[%s102 + $0x38] sm:$0xff]
  %v384 = vld [vmem:[%s102 + $0x40] sm:$0xf]
  %v385 = vld [vmem:[%s102 + $0x48] sm:$0xff]
  %v386 = vld [vmem:[%s102 + $0x50] sm:$0xff]
  %v387 = vld [vmem:[%s102 + $0x58] sm:$0xf]
  %v388 = vld [vmem:[%s102 + $0x60] sm:$0xff]
  %v389 = vld [vmem:[%s102 + $0x68] sm:$0xff]
  %v390 = vld [vmem:[%s102 + $0x70] sm:$0xf]
  %v391 = vld [vmem:[%s102 + $0x78] sm:$0xff]
  %v392 = vld [vmem:[%s102 + $0x80] sm:$0xff]
  %v393 = vld [vmem:[%s102 + $0x88] sm:$0xf]
  %v394 = vld [vmem:[%s102 + $0x90] sm:$0xff]
  %v395 = vld [vmem:[%s102 + $0x98] sm:$0xff]
  %v396 = vld [vmem:[%s102 + $0xa0] sm:$0xf]
  %v397 = vld [vmem:[%s102 + $0xa8] sm:$0xff]
  %v398 = vld [vmem:[%s102 + $0xb0] sm:$0xff]
  %v399 = vld [vmem:[%s102 + $0xb8] sm:$0xf]
  %v400 = vld [vmem:[%s102 + $0xc0] sm:$0xff]
  %v401 = vld [vmem:[%s102 + $0xc8] sm:$0xff]
  %v402 = vld [vmem:[%s102 + $0xd0] sm:$0xf]
  %v403 = vld [vmem:[%s102 + $0xd8] sm:$0xff]
  %v404 = vld [vmem:[%s102 + $0xe0] sm:$0xff]
  %v405 = vld [vmem:[%s102 + $0xe8] sm:$0xf]
  %v406 = vld [vmem:[%s102 + $0xf0] sm:$0xff]
  %v407 = vld [vmem:[%s102 + $0xf8] sm:$0xff]
  %v408 = vld [vmem:[%s102 + $0x100] sm:$0xf]
  %v409 = vld [vmem:[%s102 + $0x108] sm:$0xff]
  %v410 = vld [vmem:[%s102 + $0x110] sm:$0xff]
  %v411 = vld [vmem:[%s102 + $0x118] sm:$0xf]
  %v412 = vld [vmem:[%s102 + $0x120] sm:$0xff]
  %v413 = vld [vmem:[%s102 + $0x128] sm:$0xff]
  %v414 = vld [vmem:[%s102 + $0x130] sm:$0xf]
  %v415 = vld [vmem:[%s102 + $0x138] sm:$0xff]
  %v416 = vld [vmem:[%s102 + $0x140] sm:$0xff]
  %v417 = vld [vmem:[%s102 + $0x148] sm:$0xf]
  %v418 = vld [vmem:[%s102 + $0x150] sm:$0xff]
  %v419 = vld [vmem:[%s102 + $0x158] sm:$0xff]
  %v420 = vld [vmem:[%s102 + $0x160] sm:$0xf]
  %v421 = vld [vmem:[%s102 + $0x168] sm:$0xff]
  %v422 = vld [vmem:[%s102 + $0x170] sm:$0xff]
  %v423 = vld [vmem:[%s102 + $0x178] sm:$0xf]
  %v424 = vmul.f32 %v376, 0.2920817
  %v425 = vmul.f32 %v377, 0.2920817
  %v426 = vmul.f32 %v378, 0.2920817
  %v427 = vmul.f32 %v379, 0.2920817
  %v428 = vmul.f32 %v380, 0.2920817
  %v429 = vmul.f32 %v381, 0.2920817
  %v430 = vmul.f32 %v382, 0.2920817
  %v431 = vmul.f32 %v383, 0.2920817
  %v432 = vmul.f32 %v384, 0.2920817
  %v433 = vmul.f32 %v385, 0.2920817
  %v434 = vmul.f32 %v386, 0.2920817
  %v435 = vmul.f32 %v387, 0.2920817
  %v436 = vmul.f32 %v388, 0.2920817
  %v437 = vmul.f32 %v389, 0.2920817
  %v438 = vmul.f32 %v390, 0.2920817
  %v439 = vmul.f32 %v391, 0.2920817
  %v440 = vmul.f32 %v392, 0.2920817
  %v441 = vmul.f32 %v393, 0.2920817
  %v442 = vmul.f32 %v394, 0.2920817
  %v443 = vmul.f32 %v395, 0.2920817
  %v444 = vmul.f32 %v396, 0.2920817
  %v445 = vmul.f32 %v397, 0.2920817
  %v446 = vmul.f32 %v398, 0.2920817
  %v447 = vmul.f32 %v399, 0.2920817
  %v448 = vmul.f32 %v400, 0.2920817
  %v449 = vmul.f32 %v401, 0.2920817
  %v450 = vmul.f32 %v402, 0.2920817
  %v451 = vmul.f32 %v403, 0.2920817
  %v452 = vmul.f32 %v404, 0.2920817
  %v453 = vmul.f32 %v405, 0.2920817
  %v454 = vmul.f32 %v406, 0.2920817
  %v455 = vmul.f32 %v407, 0.2920817
  %v456 = vmul.f32 %v408, 0.2920817
  %v457 = vmul.f32 %v409, 0.2920817
  %v458 = vmul.f32 %v410, 0.2920817
  %v459 = vmul.f32 %v411, 0.2920817
  %v460 = vmul.f32 %v412, 0.2920817
  %v461 = vmul.f32 %v413, 0.2920817
  %v462 = vmul.f32 %v414, 0.2920817
  %v463 = vmul.f32 %v415, 0.2920817
  %v464 = vmul.f32 %v416, 0.2920817
  %v465 = vmul.f32 %v417, 0.2920817
  %v466 = vmul.f32 %v418, 0.2920817
  %v467 = vmul.f32 %v419, 0.2920817
  %v468 = vmul.f32 %v420, 0.2920817
  %v469 = vmul.f32 %v421, 0.2920817
  %v470 = vmul.f32 %v422, 0.2920817
  %v471 = vmul.f32 %v423, 0.2920817
  %v472 = vadd.f32 %v328, %v424
  %v473 = vadd.f32 %v329, %v425
  %v474 = vadd.f32 %v330, %v426
  %v475 = vadd.f32 %v331, %v427
  %v476 = vadd.f32 %v332, %v428
  %v477 = vadd.f32 %v333, %v429
  %v478 = vadd.f32 %v334, %v430
  %v479 = vadd.f32 %v335, %v431
  %v480 = vadd.f32 %v336, %v432
  %v481 = vadd.f32 %v337, %v433
  %v482 = vadd.f32 %v338, %v434
  %v483 = vadd.f32 %v339, %v435
  %v484 = vadd.f32 %v340, %v436
  %v485 = vadd.f32 %v341, %v437
  %v486 = vadd.f32 %v342, %v438
  %v487 = vadd.f32 %v343, %v439
  %v488 = vadd.f32 %v344, %v440
  %v489 = vadd.f32 %v345, %v441
  %v490 = vadd.f32 %v346, %v442
  %v491 = vadd.f32 %v347, %v443
  %v492 = vadd.f32 %v348, %v444
  %v493 = vadd.f32 %v349, %v445
  %v494 = vadd.f32 %v350, %v446
  %v495 = vadd.f32 %v351, %v447
  %v496 = vadd.f32 %v352, %v448
  %v497 = vadd.f32 %v353, %v449
  %v498 = vadd.f32 %v354, %v450
  %v499 = vadd.f32 %v355, %v451
  %v500 = vadd.f32 %v356, %v452
  %v501 = vadd.f32 %v357, %v453
  %v502 = vadd.f32 %v358, %v454
  %v503 = vadd.f32 %v359, %v455
  %v504 = vadd.f32 %v360, %v456
  %v505 = vadd.f32 %v361, %v457
  %v506 = vadd.f32 %v362, %v458
  %v507 = vadd.f32 %v363, %v459
  %v508 = vadd.f32 %v364, %v460
  %v509 = vadd.f32 %v365, %v461
  %v510 = vadd.f32 %v366, %v462
  %v511 = vadd.f32 %v367, %v463
  %v512 = vadd.f32 %v368, %v464
  %v513 = vadd.f32 %v369, %v465
  %v514 = vadd.f32 %v370, %v466
  %v515 = vadd.f32 %v371, %v467
  %v516 = vadd.f32 %v372, %v468
  %v517 = vadd.f32 %v373, %v469
  %v518 = vadd.f32 %v374, %v470
  %v519 = vadd.f32 %v375, %v471
  %s520 = scalar_lea.vmem [#allocation2], 72
  %v521 = vld [vmem:[%s520] sm:$0xff]
  %v522 = vld [vmem:[%s520 + $0x8] sm:$0xff]
  %v523 = vld [vmem:[%s520 + $0x10] sm:$0xf]
  %v524 = vld [vmem:[%s520 + $0x18] sm:$0xff]
  %v525 = vld [vmem:[%s520 + $0x20] sm:$0xff]
  %v526 = vld [vmem:[%s520 + $0x28] sm:$0xf]
  %v527 = vld [vmem:[%s520 + $0x30] sm:$0xff]
  %v528 = vld [vmem:[%s520 + $0x38] sm:$0xff]
  %v529 = vld [vmem:[%s520 + $0x40] sm:$0xf]
  %v530 = vld [vmem:[%s520 + $0x48] sm:$0xff]
  %v531 = vld [vmem:[%s520 + $0x50] sm:$0xff]
  %v532 = vld [vmem:[%s520 + $0x58] sm:$0xf]
  %v533 = vld [vmem:[%s520 + $0x60] sm:$0xff]
  %v534 = vld [vmem:[%s520 + $0x68] sm:$0xff]
  %v535 = vld [vmem:[%s520 + $0x70] sm:$0xf]
  %v536 = vld [vmem:[%s520 + $0x78] sm:$0xff]
  %v537 = vld [vmem:[%s520 + $0x80] sm:$0xff]
  %v538 = vld [vmem:[%s520 + $0x88] sm:$0xf]
  %v539 = vld [vmem:[%s520 + $0x90] sm:$0xff]
  %v540 = vld [vmem:[%s520 + $0x98] sm:$0xff]
  %v541 = vld [vmem:[%s520 + $0xa0] sm:$0xf]
  %v542 = vld [vmem:[%s520 + $0xa8] sm:$0xff]
  %v543 = vld [vmem:[%s520 + $0xb0] sm:$0xff]
  %v544 = vld [vmem:[%s520 + $0xb8] sm:$0xf]
  %v545 = vld [vmem:[%s520 + $0xc0] sm:$0xff]
  %v546 = vld [vmem:[%s520 + $0xc8] sm:$0xff]
  %v547 = vld [vmem:[%s520 + $0xd0] sm:$0xf]
  %v548 = vld [vmem:[%s520 + $0xd8] sm:$0xff]
  %v549 = vld [vmem:[%s520 + $0xe0] sm:$0xff]
  %v550 = vld [vmem:[%s520 + $0xe8] sm:$0xf]
  %v551 = vld [vmem:[%s520 + $0xf0] sm:$0xff]
  %v552 = vld [vmem:[%s520 + $0xf8] sm:$0xff]
  %v553 = vld [vmem:[%s520 + $0x100] sm:$0xf]
  %v554 = vld [vmem:[%s520 + $0x108] sm:$0xff]
  %v555 = vld [vmem:[%s520 + $0x110] sm:$0xff]
  %v556 = vld [vmem:[%s520 + $0x118] sm:$0xf]
  %v557 = vld [vmem:[%s520 + $0x120] sm:$0xff]
  %v558 = vld [vmem:[%s520 + $0x128] sm:$0xff]
  %v559 = vld [vmem:[%s520 + $0x130] sm:$0xf]
  %v560 = vld [vmem:[%s520 + $0x138] sm:$0xff]
  %v561 = vld [vmem:[%s520 + $0x140] sm:$0xff]
  %v562 = vld [vmem:[%s520 + $0x148] sm:$0xf]
  %v563 = vld [vmem:[%s520 + $0x150] sm:$0xff]
  %v564 = vld [vmem:[%s520 + $0x158] sm:$0xff]
  %v565 = vld [vmem:[%s520 + $0x160] sm:$0xf]
  %v566 = vld [vmem:[%s520 + $0x168] sm:$0xff]
  %v567 = vld [vmem:[%s520 + $0x170] sm:$0xff]
  %v568 = vld [vmem:[%s520 + $0x178] sm:$0xf]
  %v569 = vmul.f32 %v521, 0.23388076
  %v570 = vmul.f32 %v522, 0.23388076
  %v571 = vmul.f32 %v523, 0.23388076
  %v572 = vmul.f32 %v524, 0.23388076
  %v573 = vmul.f32 %v525, 0.23388076
  %v574 = vmul.f32 %v526, 0.23388076
  %v575 = vmul.f32 %v527, 0.23388076
  %v576 = vmul.f32 %v528, 0.23388076
  %v577 = vmul.f32 %v529, 0.23388076
  %v578 = vmul.f32 %v530, 0.23388076
  %v579 = vmul.f32 %v531, 0.23388076
  %v580 = vmul.f32 %v532, 0.23388076
  %v581 = vmul.f32 %v533, 0.23388076
  %v582 = vmul.f32 %v534, 0.23388076
  %v583 = vmul.f32 %v535, 0.23388076
  %v584 = vmul.f32 %v536, 0.23388076
  %v585 = vmul.f32 %v537, 0.23388076
  %v586 = vmul.f32 %v538, 0.23388076
  %v587 = vmul.f32 %v539, 0.23388076
  %v588 = vmul.f32 %v540, 0.23388076
  %v589 = vmul.f32 %v541, 0.23388076
  %v590 = vmul.f32 %v542, 0.23388076
  %v591 = vmul.f32 %v543, 0.23388076
  %v592 = vmul.f32 %v544, 0.23388076
  %v593 = vmul.f32 %v545, 0.23388076
  %v594 = vmul.f32 %v546, 0.23388076
  %v595 = vmul.f32 %v547, 0.23388076
  %v596 = vmul.f32 %v548, 0.23388076
  %v597 = vmul.f32 %v549, 0.23388076
  %v598 = vmul.f32 %v550, 0.23388076
  %v599 = vmul.f32 %v551, 0.23388076
  %v600 = vmul.f32 %v552, 0.23388076
  %v601 = vmul.f32 %v553, 0.23388076
  %v602 = vmul.f32 %v554, 0.23388076
  %v603 = vmul.f32 %v555, 0.23388076
  %v604 = vmul.f32 %v556, 0.23388076
  %v605 = vmul.f32 %v557, 0.23388076
  %v606 = vmul.f32 %v558, 0.23388076
  %v607 = vmul.f32 %v559, 0.23388076
  %v608 = vmul.f32 %v560, 0.23388076
  %v609 = vmul.f32 %v561, 0.23388076
  %v610 = vmul.f32 %v562, 0.23388076
  %v611 = vmul.f32 %v563, 0.23388076
  %v612 = vmul.f32 %v564, 0.23388076
  %v613 = vmul.f32 %v565, 0.23388076
  %v614 = vmul.f32 %v566, 0.23388076
  %v615 = vmul.f32 %v567, 0.23388076
  %v616 = vmul.f32 %v568, 0.23388076
  %v617 = vadd.f32 %v472, %v569
  %v618 = vadd.f32 %v473, %v570
  %v619 = vadd.f32 %v474, %v571
  %v620 = vadd.f32 %v475, %v572
  %v621 = vadd.f32 %v476, %v573
  %v622 = vadd.f32 %v477, %v574
  %v623 = vadd.f32 %v478, %v575
  %v624 = vadd.f32 %v479, %v576
  %v625 = vadd.f32 %v480, %v577
  %v626 = vadd.f32 %v481, %v578
  %v627 = vadd.f32 %v482, %v579
  %v628 = vadd.f32 %v483, %v580
  %v629 = vadd.f32 %v484, %v581
  %v630 = vadd.f32 %v485, %v582
  %v631 = vadd.f32 %v486, %v583
  %v632 = vadd.f32 %v487, %v584
  %v633 = vadd.f32 %v488, %v585
  %v634 = vadd.f32 %v489, %v586
  %v635 = vadd.f32 %v490, %v587
  %v636 = vadd.f32 %v491, %v588
  %v637 = vadd.f32 %v492, %v589
  %v638 = vadd.f32 %v493, %v590
  %v639 = vadd.f32 %v494, %v591
  %v640 = vadd.f32 %v495, %v592
  %v641 = vadd.f32 %v496, %v593
  %v642 = vadd.f32 %v497, %v594
  %v643 = vadd.f32 %v498, %v595
  %v644 = vadd.f32 %v499, %v596
  %v645 = vadd.f32 %v500, %v597
  %v646 = vadd.f32 %v501, %v598
  %v647 = vadd.f32 %v502, %v599
  %v648 = vadd.f32 %v503, %v600
  %v649 = vadd.f32 %v504, %v601
  %v650 = vadd.f32 %v505, %v602
  %v651 = vadd.f32 %v506, %v603
  %v652 = vadd.f32 %v507, %v604
  %v653 = vadd.f32 %v508, %v605
  %v654 = vadd.f32 %v509, %v606
  %v655 = vadd.f32 %v510, %v607
  %v656 = vadd.f32 %v511, %v608
  %v657 = vadd.f32 %v512, %v609
  %v658 = vadd.f32 %v513, %v610
  %v659 = vadd.f32 %v514, %v611
  %v660 = vadd.f32 %v515, %v612
  %v661 = vadd.f32 %v516, %v613
  %v662 = vadd.f32 %v517, %v614
  %v663 = vadd.f32 %v518, %v615
  %v664 = vadd.f32 %v519, %v616
  %s665 = scalar_lea.vmem [#allocation2], 96
  %v666 = vld [vmem:[%s665] sm:$0xff]
  %v667 = vld [vmem:[%s665 + $0x8] sm:$0xff]
  %v668 = vld [vmem:[%s665 + $0x10] sm:$0xf]
  %v669 = vld [vmem:[%s665 + $0x18] sm:$0xff]
  %v670 = vld [vmem:[%s665 + $0x20] sm:$0xff]
  %v671 = vld [vmem:[%s665 + $0x28] sm:$0xf]
  %v672 = vld [vmem:[%s665 + $0x30] sm:$0xff]
  %v673 = vld [vmem:[%s665 + $0x38] sm:$0xff]
  %v674 = vld [vmem:[%s665 + $0x40] sm:$0xf]
  %v675 = vld [vmem:[%s665 + $0x48] sm:$0xff]
  %v676 = vld [vmem:[%s665 + $0x50] sm:$0xff]
  %v677 = vld [vmem:[%s665 + $0x58] sm:$0xf]
  %v678 = vld [vmem:[%s665 + $0x60] sm:$0xff]
  %v679 = vld [vmem:[%s665 + $0x68] sm:$0xff]
  %v680 = vld [vmem:[%s665 + $0x70] sm:$0xf]
  %v681 = vld [vmem:[%s665 + $0x78] sm:$0xff]
  %v682 = vld [vmem:[%s665 + $0x80] sm:$0xff]
  %v683 = vld [vmem:[%s665 + $0x88] sm:$0xf]
  %v684 = vld [vmem:[%s665 + $0x90] sm:$0xff]
  %v685 = vld [vmem:[%s665 + $0x98] sm:$0xff]
  %v686 = vld [vmem:[%s665 + $0xa0] sm:$0xf]
  %v687 = vld [vmem:[%s665 + $0xa8] sm:$0xff]
  %v688 = vld [vmem:[%s665 + $0xb0] sm:$0xff]
  %v689 = vld [vmem:[%s665 + $0xb8] sm:$0xf]
  %v690 = vld [vmem:[%s665 + $0xc0] sm:$0xff]
  %v691 = vld [vmem:[%s665 + $0xc8] sm:$0xff]
  %v692 = vld [vmem:[%s665 + $0xd0] sm:$0xf]
  %v693 = vld [vmem:[%s665 + $0xd8] sm:$0xff]
  %v694 = vld [vmem:[%s665 + $0xe0] sm:$0xff]
  %v695 = vld [vmem:[%s665 + $0xe8] sm:$0xf]
  %v696 = vld [vmem:[%s665 + $0xf0] sm:$0xff]
  %v697 = vld [vmem:[%s665 + $0xf8] sm:$0xff]
  %v698 = vld [vmem:[%s665 + $0x100] sm:$0xf]
  %v699 = vld [vmem:[%s665 + $0x108] sm:$0xff]
  %v700 = vld [vmem:[%s665 + $0x110] sm:$0xff]
  %v701 = vld [vmem:[%s665 + $0x118] sm:$0xf]
  %v702 = vld [vmem:[%s665 + $0x120] sm:$0xff]
  %v703 = vld [vmem:[%s665 + $0x128] sm:$0xff]
  %v704 = vld [vmem:[%s665 + $0x130] sm:$0xf]
  %v705 = vld [vmem:[%s665 + $0x138] sm:$0xff]
  %v706 = vld [vmem:[%s665 + $0x140] sm:$0xff]
  %v707 = vld [vmem:[%s665 + $0x148] sm:$0xf]
  %v708 = vld [vmem:[%s665 + $0x150] sm:$0xff]
  %v709 = vld [vmem:[%s665 + $0x158] sm:$0xff]
  %v710 = vld [vmem:[%s665 + $0x160] sm:$0xf]
  %v711 = vld [vmem:[%s665 + $0x168] sm:$0xff]
  %v712 = vld [vmem:[%s665 + $0x170] sm:$0xff]
  %v713 = vld [vmem:[%s665 + $0x178] sm:$0xf]
  %v714 = vmul.f32 %v666, 0.120078385
  %v715 = vmul.f32 %v667, 0.120078385
  %v716 = vmul.f32 %v668, 0.120078385
  %v717 = vmul.f32 %v669, 0.120078385
  %v718 = vmul.f32 %v670, 0.120078385
  %v719 = vmul.f32 %v671, 0.120078385
  %v720 = vmul.f32 %v672, 0.120078385
  %v721 = vmul.f32 %v673, 0.120078385
  %v722 = vmul.f32 %v674, 0.120078385
  %v723 = vmul.f32 %v675, 0.120078385
  %v724 = vmul.f32 %v676, 0.120078385
  %v725 = vmul.f32 %v677, 0.120078385
  %v726 = vmul.f32 %v678, 0.120078385
  %v727 = vmul.f32 %v679, 0.120078385
  %v728 = vmul.f32 %v680, 0.120078385
  %v729 = vmul.f32 %v681, 0.120078385
  %v730 = vmul.f32 %v682, 0.120078385
  %v731 = vmul.f32 %v683, 0.120078385
  %v732 = vmul.f32 %v684, 0.120078385
  %v733 = vmul.f32 %v685, 0.120078385
  %v734 = vmul.f32 %v686, 0.120078385
  %v735 = vmul.f32 %v687, 0.120078385
  %v736 = vmul.f32 %v688, 0.120078385
  %v737 = vmul.f32 %v689, 0.120078385
  %v738 = vmul.f32 %v690, 0.120078385
  %v739 = vmul.f32 %v691, 0.120078385
  %v740 = vmul.f32 %v692, 0.120078385
  %v741 = vmul.f32 %v693, 0.120078385
  %v742 = vmul.f32 %v694, 0.120078385
  %v743 = vmul.f32 %v695, 0.120078385
  %v744 = vmul.f32 %v696, 0.120078385
  %v745 = vmul.f32 %v697, 0.120078385
  %v746 = vmul.f32 %v698, 0.120078385
  %v747 = vmul.f32 %v699, 0.120078385
  %v748 = vmul.f32 %v700, 0.120078385
  %v749 = vmul.f32 %v701, 0.120078385
  %v750 = vmul.f32 %v702, 0.120078385
  %v751 = vmul.f32 %v703, 0.120078385
  %v752 = vmul.f32 %v704, 0.120078385
  %v753 = vmul.f32 %v705, 0.120078385
  %v754 = vmul.f32 %v706, 0.120078385
  %v755 = vmul.f32 %v707, 0.120078385
  %v756 = vmul.f32 %v708, 0.120078385
  %v757 = vmul.f32 %v709, 0.120078385
  %v758 = vmul.f32 %v710, 0.120078385
  %v759 = vmul.f32 %v711, 0.120078385
  %v760 = vmul.f32 %v712, 0.120078385
  %v761 = vmul.f32 %v713, 0.120078385
  %v762 = vadd.f32 %v617, %v714
  %v763 = vadd.f32 %v618, %v715
  %v764 = vadd.f32 %v619, %v716
  %v765 = vadd.f32 %v620, %v717
  %v766 = vadd.f32 %v621, %v718
  %v767 = vadd.f32 %v622, %v719
  %v768 = vadd.f32 %v623, %v720
  %v769 = vadd.f32 %v624, %v721
  %v770 = vadd.f32 %v625, %v722
  %v771 = vadd.f32 %v626, %v723
  %v772 = vadd.f32 %v627, %v724
  %v773 = vadd.f32 %v628, %v725
  %v774 = vadd.f32 %v629, %v726
  %v775 = vadd.f32 %v630, %v727
  %v776 = vadd.f32 %v631, %v728
  %v777 = vadd.f32 %v632, %v729
  %v778 = vadd.f32 %v633, %v730
  %v779 = vadd.f32 %v634, %v731
  %v780 = vadd.f32 %v635, %v732
  %v781 = vadd.f32 %v636, %v733
  %v782 = vadd.f32 %v637, %v734
  %v783 = vadd.f32 %v638, %v735
  %v784 = vadd.f32 %v639, %v736
  %v785 = vadd.f32 %v640, %v737
  %v786 = vadd.f32 %v641, %v738
  %v787 = vadd.f32 %v642, %v739
  %v788 = vadd.f32 %v643, %v740
  %v789 = vadd.f32 %v644, %v741
  %v790 = vadd.f32 %v645, %v742
  %v791 = vadd.f32 %v646, %v743
  %v792 = vadd.f32 %v647, %v744
  %v793 = vadd.f32 %v648, %v745
  %v794 = vadd.f32 %v649, %v746
  %v795 = vadd.f32 %v650, %v747
  %v796 = vadd.f32 %v651, %v748
  %v797 = vadd.f32 %v652, %v749
  %v798 = vadd.f32 %v653, %v750
  %v799 = vadd.f32 %v654, %v751
  %v800 = vadd.f32 %v655, %v752
  %v801 = vadd.f32 %v656, %v753
  %v802 = vadd.f32 %v657, %v754
  %v803 = vadd.f32 %v658, %v755
  %v804 = vadd.f32 %v659, %v756
  %v805 = vadd.f32 %v660, %v757
  %v806 = vadd.f32 %v661, %v758
  %v807 = vadd.f32 %v662, %v759
  %v808 = vadd.f32 %v663, %v760
  %v809 = vadd.f32 %v664, %v761
  %810 = vst.msk [vmem:[#allocation3] sm:$0xff] %vm8, %v762
  %811 = vst.msk [vmem:[#allocation3 + $0x8] sm:$0xff] %vm8, %v763
  %812 = vst.msk [vmem:[#allocation3 + $0x10] sm:$0xf] %vm11, %v764
  %813 = vst.msk [vmem:[#allocation3 + $0x18] sm:$0xff] %vm8, %v765
  %814 = vst.msk [vmem:[#allocation3 + $0x20] sm:$0xff] %vm8, %v766
  %815 = vst.msk [vmem:[#allocation3 + $0x28] sm:$0xf] %vm11, %v767
  %816 = vst.msk [vmem:[#allocation3 + $0x30] sm:$0xff] %vm8, %v768
  %817 = vst.msk [vmem:[#allocation3 + $0x38] sm:$0xff] %vm8, %v769
  %818 = vst.msk [vmem:[#allocation3 + $0x40] sm:$0xf] %vm11, %v770
  %819 = vst.msk [vmem:[#allocation3 + $0x48] sm:$0xff] %vm8, %v771
  %820 = vst.msk [vmem:[#allocation3 + $0x50] sm:$0xff] %vm8, %v772
  %821 = vst.msk [vmem:[#allocation3 + $0x58] sm:$0xf] %vm11, %v773
  %822 = vst.msk [vmem:[#allocation3 + $0x60] sm:$0xff] %vm8, %v774
  %823 = vst.msk [vmem:[#allocation3 + $0x68] sm:$0xff] %vm8, %v775
  %824 = vst.msk [vmem:[#allocation3 + $0x70] sm:$0xf] %vm11, %v776
  %825 = vst.msk [vmem:[#allocation3 + $0x78] sm:$0xff] %vm8, %v777
  %826 = vst.msk [vmem:[#allocation3 + $0x80] sm:$0xff] %vm8, %v778
  %827 = vst.msk [vmem:[#allocation3 + $0x88] sm:$0xf] %vm11, %v779
  %828 = vst.msk [vmem:[#allocation3 + $0x90] sm:$0xff] %vm8, %v780
  %829 = vst.msk [vmem:[#allocation3 + $0x98] sm:$0xff] %vm8, %v781
  %830 = vst.msk [vmem:[#allocation3 + $0xa0] sm:$0xf] %vm11, %v782
  %831 = vst.msk [vmem:[#allocation3 + $0xa8] sm:$0xff] %vm8, %v783
  %832 = vst.msk [vmem:[#allocation3 + $0xb0] sm:$0xff] %vm8, %v784
  %833 = vst.msk [vmem:[#allocation3 + $0xb8] sm:$0xf] %vm11, %v785
  %834 = vst.msk [vmem:[#allocation3 + $0xc0] sm:$0xff] %vm8, %v786
  %835 = vst.msk [vmem:[#allocation3 + $0xc8] sm:$0xff] %vm8, %v787
  %836 = vst.msk [vmem:[#allocation3 + $0xd0] sm:$0xf] %vm11, %v788
  %837 = vst.msk [vmem:[#allocation3 + $0xd8] sm:$0xff] %vm8, %v789
  %838 = vst.msk [vmem:[#allocation3 + $0xe0] sm:$0xff] %vm8, %v790
  %839 = vst.msk [vmem:[#allocation3 + $0xe8] sm:$0xf] %vm11, %v791
  %840 = vst.msk [vmem:[#allocation3 + $0xf0] sm:$0xff] %vm8, %v792
  %841 = vst.msk [vmem:[#allocation3 + $0xf8] sm:$0xff] %vm8, %v793
  %842 = vst.msk [vmem:[#allocation3 + $0x100] sm:$0xf] %vm11, %v794
  %843 = vst.msk [vmem:[#allocation3 + $0x108] sm:$0xff] %vm8, %v795
  %844 = vst.msk [vmem:[#allocation3 + $0x110] sm:$0xff] %vm8, %v796
  %845 = vst.msk [vmem:[#allocation3 + $0x118] sm:$0xf] %vm11, %v797
  %846 = vst.msk [vmem:[#allocation3 + $0x120] sm:$0xff] %vm8, %v798
  %847 = vst.msk [vmem:[#allocation3 + $0x128] sm:$0xff] %vm8, %v799
  %848 = vst.msk [vmem:[#allocation3 + $0x130] sm:$0xf] %vm11, %v800
  %849 = vst.msk [vmem:[#allocation3 + $0x138] sm:$0xff] %vm8, %v801
  %850 = vst.msk [vmem:[#allocation3 + $0x140] sm:$0xff] %vm8, %v802
  %851 = vst.msk [vmem:[#allocation3 + $0x148] sm:$0xf] %vm11, %v803
  %852 = vst.msk [vmem:[#allocation3 + $0x150] sm:$0xff] %vm8, %v804
  %853 = vst.msk [vmem:[#allocation3 + $0x158] sm:$0xff] %vm8, %v805
  %854 = vst.msk [vmem:[#allocation3 + $0x160] sm:$0xf] %vm11, %v806
  %855 = vst.msk [vmem:[#allocation3 + $0x168] sm:$0xff] %vm8, %v807
  %856 = vst.msk [vmem:[#allocation3 + $0x170] sm:$0xff] %vm8, %v808
  %857 = vst.msk [vmem:[#allocation3 + $0x178] sm:$0xf] %vm11, %v809
  %v858 = vld [vmem:[#allocation3] sm:$0xff]
  %v859 = vld [vmem:[#allocation3 + $0x8] sm:$0xff]
  %v860 = vld [vmem:[#allocation3 + $0x18] sm:$0xff]
  %v861 = vld [vmem:[#allocation3 + $0x20] sm:$0xff]
  %v862 = vld [vmem:[#allocation3 + $0x30] sm:$0xff]
  %v863 = vld [vmem:[#allocation3 + $0x38] sm:$0xff]
  %v864 = vld [vmem:[#allocation3 + $0x48] sm:$0xff]
  %v865 = vld [vmem:[#allocation3 + $0x50] sm:$0xff]
  %v866 = vld [vmem:[#allocation3 + $0x60] sm:$0xff]
  %v867 = vld [vmem:[#allocation3 + $0x68] sm:$0xff]
  %v868 = vld [vmem:[#allocation3 + $0x78] sm:$0xff]
  %v869 = vld [vmem:[#allocation3 + $0x80] sm:$0xff]
  %v870 = vld [vmem:[#allocation3 + $0x90] sm:$0xff]
  %v871 = vld [vmem:[#allocation3 + $0x98] sm:$0xff]
  %v872 = vld [vmem:[#allocation3 + $0xa8] sm:$0xff]
  %v873 = vld [vmem:[#allocation3 + $0xb0] sm:$0xff]
  %v874 = vld [vmem:[#allocation3 + $0xc0] sm:$0xff]
  %v875 = vld [vmem:[#allocation3 + $0xc8] sm:$0xff]
  %v876 = vld [vmem:[#allocation3 + $0xd8] sm:$0xff]
  %v877 = vld [vmem:[#allocation3 + $0xe0] sm:$0xff]
  %v878 = vld [vmem:[#allocation3 + $0xf0] sm:$0xff]
  %v879 = vld [vmem:[#allocation3 + $0xf8] sm:$0xff]
  %v880 = vld [vmem:[#allocation3 + $0x108] sm:$0xff]
  %v881 = vld [vmem:[#allocation3 + $0x110] sm:$0xff]
  %v882 = vld [vmem:[#allocation3 + $0x120] sm:$0xff]
  %v883 = vld [vmem:[#allocation3 + $0x128] sm:$0xff]
  %v884 = vld [vmem:[#allocation3 + $0x138] sm:$0xff]
  %v885 = vld [vmem:[#allocation3 + $0x140] sm:$0xff]
  %v886 = vld [vmem:[#allocation3 + $0x150] sm:$0xff]
  %v887 = vld [vmem:[#allocation3 + $0x158] sm:$0xff]
  %v888 = vld [vmem:[#allocation3 + $0x168] sm:$0xff]
  %v889 = vld [vmem:[#allocation3 + $0x170] sm:$0xff]
  %v890 = vmul.f32 %v858, 0.120078385
  %v891 = vmul.f32 %v859, 0.120078385
  %v892 = vmul.f32 %v860, 0.120078385
  %v893 = vmul.f32 %v861, 0.120078385
  %v894 = vmul.f32 %v862, 0.120078385
  %v895 = vmul.f32 %v863, 0.120078385
  %v896 = vmul.f32 %v864, 0.120078385
  %v897 = vmul.f32 %v865, 0.120078385
  %v898 = vmul.f32 %v866, 0.120078385
  %v899 = vmul.f32 %v867, 0.120078385
  %v900 = vmul.f32 %v868, 0.120078385
  %v901 = vmul.f32 %v869, 0.120078385
  %v902 = vmul.f32 %v870, 0.120078385
  %v903 = vmul.f32 %v871, 0.120078385
  %v904 = vmul.f32 %v872, 0.120078385
  %v905 = vmul.f32 %v873, 0.120078385
  %v906 = vmul.f32 %v874, 0.120078385
  %v907 = vmul.f32 %v875, 0.120078385
  %v908 = vmul.f32 %v876, 0.120078385
  %v909 = vmul.f32 %v877, 0.120078385
  %v910 = vmul.f32 %v878, 0.120078385
  %v911 = vmul.f32 %v879, 0.120078385
  %v912 = vmul.f32 %v880, 0.120078385
  %v913 = vmul.f32 %v881, 0.120078385
  %v914 = vmul.f32 %v882, 0.120078385
  %v915 = vmul.f32 %v883, 0.120078385
  %v916 = vmul.f32 %v884, 0.120078385
  %v917 = vmul.f32 %v885, 0.120078385
  %v918 = vmul.f32 %v886, 0.120078385
  %v919 = vmul.f32 %v887, 0.120078385
  %v920 = vmul.f32 %v888, 0.120078385
  %v921 = vmul.f32 %v889, 0.120078385
  %v922 = vld [vmem:[#allocation3 + $0x1] sm:$0xff]
  %v923 = vld [vmem:[#allocation3 + $0x9] sm:$0xff]
  %v924 = vld [vmem:[#allocation3 + $0x19] sm:$0xff]
  %v925 = vld [vmem:[#allocation3 + $0x21] sm:$0xff]
  %v926 = vld [vmem:[#allocation3 + $0x31] sm:$0xff]
  %v927 = vld [vmem:[#allocation3 + $0x39] sm:$0xff]
  %v928 = vld [vmem:[#allocation3 + $0x49] sm:$0xff]
  %v929 = vld [vmem:[#allocation3 + $0x51] sm:$0xff]
  %v930 = vld [vmem:[#allocation3 + $0x61] sm:$0xff]
  %v931 = vld [vmem:[#allocation3 + $0x69] sm:$0xff]
  %v932 = vld [vmem:[#allocation3 + $0x79] sm:$0xff]
  %v933 = vld [vmem:[#allocation3 + $0x81] sm:$0xff]
  %v934 = vld [vmem:[#allocation3 + $0x91] sm:$0xff]
  %v935 = vld [vmem:[#allocation3 + $0x99] sm:$0xff]
  %v936 = vld [vmem:[#allocation3 + $0xa9] sm:$0xff]
  %v937 = vld [vmem:[#allocation3 + $0xb1] sm:$0xff]
  %v938 = vld [vmem:[#allocation3 + $0xc1] sm:$0xff]
  %v939 = vld [vmem:[#allocation3 + $0xc9] sm:$0xff]
  %v940 = vld [vmem:[#allocation3 + $0xd9] sm:$0xff]
  %v941 = vld [vmem:[#allocation3 + $0xe1] sm:$0xff]
  %v942 = vld [vmem:[#allocation3 + $0xf1] sm:$0xff]
  %v943 = vld [vmem:[#allocation3 + $0xf9] sm:$0xff]
  %v944 = vld [vmem:[#allocation3 + $0x109] sm:$0xff]
  %v945 = vld [vmem:[#allocation3 + $0x111] sm:$0xff]
  %v946 = vld [vmem:[#allocation3 + $0x121] sm:$0xff]
  %v947 = vld [vmem:[#allocation3 + $0x129] sm:$0xff]
  %v948 = vld [vmem:[#allocation3 + $0x139] sm:$0xff]
  %v949 = vld [vmem:[#allocation3 + $0x141] sm:$0xff]
  %v950 = vld [vmem:[#allocation3 + $0x151] sm:$0xff]
  %v951 = vld [vmem:[#allocation3 + $0x159] sm:$0xff]
  %v952 = vld [vmem:[#allocation3 + $0x169] sm:$0xff]
  %v953 = vld [vmem:[#allocation3 + $0x171] sm:$0xff]
  %v954 = vmul.f32 %v922, 0.23388076
  %v955 = vmul.f32 %v923, 0.23388076
  %v956 = vmul.f32 %v924, 0.23388076
  %v957 = vmul.f32 %v925, 0.23388076
  %v958 = vmul.f32 %v926, 0.23388076
  %v959 = vmul.f32 %v927, 0.23388076
  %v960 = vmul.f32 %v928, 0.23388076
  %v961 = vmul.f32 %v929, 0.23388076
  %v962 = vmul.f32 %v930, 0.23388076
  %v963 = vmul.f32 %v931, 0.23388076
  %v964 = vmul.f32 %v932, 0.23388076
  %v965 = vmul.f32 %v933, 0.23388076
  %v966 = vmul.f32 %v934, 0.23388076
  %v967 = vmul.f32 %v935, 0.23388076
  %v968 = vmul.f32 %v936, 0.23388076
  %v969 = vmul.f32 %v937, 0.23388076
  %v970 = vmul.f32 %v938, 0.23388076
  %v971 = vmul.f32 %v939, 0.23388076
  %v972 = vmul.f32 %v940, 0.23388076
  %v973 = vmul.f32 %v941, 0.23388076
  %v974 = vmul.f32 %v942, 0.23388076
  %v975 = vmul.f32 %v943, 0.23388076
  %v976 = vmul.f32 %v944, 0.23388076
  %v977 = vmul.f32 %v945, 0.23388076
  %v978 = vmul.f32 %v946, 0.23388076
  %v979 = vmul.f32 %v947, 0.23388076
  %v980 = vmul.f32 %v948, 0.23388076
  %v981 = vmul.f32 %v949, 0.23388076
  %v982 = vmul.f32 %v950, 0.23388076
  %v983 = vmul.f32 %v951, 0.23388076
  %v984 = vmul.f32 %v952, 0.23388076
  %v985 = vmul.f32 %v953, 0.23388076
  %v986 = vadd.f32 %v890, %v954
  %v987 = vadd.f32 %v891, %v955
  %v988 = vadd.f32 %v892, %v956
  %v989 = vadd.f32 %v893, %v957
  %v990 = vadd.f32 %v894, %v958
  %v991 = vadd.f32 %v895, %v959
  %v992 = vadd.f32 %v896, %v960
  %v993 = vadd.f32 %v897, %v961
  %v994 = vadd.f32 %v898, %v962
  %v995 = vadd.f32 %v899, %v963
  %v996 = vadd.f32 %v900, %v964
  %v997 = vadd.f32 %v901, %v965
  %v998 = vadd.f32 %v902, %v966
  %v999 = vadd.f32 %v903, %v967
  %v1000 = vadd.f32 %v904, %v968
  %v1001 = vadd.f32 %v905, %v969
  %v1002 = vadd.f32 %v906, %v970
  %v1003 = vadd.f32 %v907, %v971
  %v1004 = vadd.f32 %v908, %v972
  %v1005 = vadd.f32 %v909, %v973
  %v1006 = vadd.f32 %v910, %v974
  %v1007 = vadd.f32 %v911, %v975
  %v1008 = vadd.f32 %v912, %v976
  %v1009 = vadd.f32 %v913, %v977
  %v1010 = vadd.f32 %v914, %v978
  %v1011 = vadd.f32 %v915, %v979
  %v1012 = vadd.f32 %v916, %v980
  %v1013 = vadd.f32 %v917, %v981
  %v1014 = vadd.f32 %v918, %v982
  %v1015 = vadd.f32 %v919, %v983
  %v1016 = vadd.f32 %v920, %v984
  %v1017 = vadd.f32 %v921, %v985
  %v1018 = vld [vmem:[#allocation3 + $0x2] sm:$0xff]
  %v1019 = vld [vmem:[#allocation3 + $0xa] sm:$0xff]
  %v1020 = vld [vmem:[#allocation3 + $0x1a] sm:$0xff]
  %v1021 = vld [vmem:[#allocation3 + $0x22] sm:$0xff]
  %v1022 = vld [vmem:[#allocation3 + $0x32] sm:$0xff]
  %v1023 = vld [vmem:[#allocation3 + $0x3a] sm:$0xff]
  %v1024 = vld [vmem:[#allocation3 + $0x4a] sm:$0xff]
  %v1025 = vld [vmem:[#allocation3 + $0x52] sm:$0xff]
  %v1026 = vld [vmem:[#allocation3 + $0x62] sm:$0xff]
  %v1027 = vld [vmem:[#allocation3 + $0x6a] sm:$0xff]
  %v1028 = vld [vmem:[#allocation3 + $0x7a] sm:$0xff]
  %v1029 = vld [vmem:[#allocation3 + $0x82] sm:$0xff]
  %v1030 = vld [vmem:[#allocation3 + $0x92] sm:$0xff]
  %v1031 = vld [vmem:[#allocation3 + $0x9a] sm:$0xff]
  %v1032 = vld [vmem:[#allocation3 + $0xaa] sm:$0xff]
  %v1033 = vld [vmem:[#allocation3 + $0xb2] sm:$0xff]
  %v1034 = vld [vmem:[#allocation3 + $0xc2] sm:$0xff]
  %v1035 = vld [vmem:[#allocation3 + $0xca] sm:$0xff]
  %v1036 = vld [vmem:[#allocation3 + $0xda] sm:$0xff]
  %v1037 = vld [vmem:[#allocation3 + $0xe2] sm:$0xff]
  %v1038 = vld [vmem:[#allocation3 + $0xf2] sm:$0xff]
  %v1039 = vld [vmem:[#allocation3 + $0xfa] sm:$0xff]
  %v1040 = vld [vmem:[#allocation3 + $0x10a] sm:$0xff]
  %v1041 = vld [vmem:[#allocation3 + $0x112] sm:$0xff]
  %v1042 = vld [vmem:[#allocation3 + $0x122] sm:$0xff]
  %v1043 = vld [vmem:[#allocation3 + $0x12a] sm:$0xff]
  %v1044 = vld [vmem:[#allocation3 + $0x13a] sm:$0xff]
  %v1045 = vld [vmem:[#allocation3 + $0x142] sm:$0xff]
  %v1046 = vld [vmem:[#allocation3 + $0x152] sm:$0xff]
  %v1047 = vld [vmem:[#allocation3 + $0x15a] sm:$0xff]
  %v1048 = vld [vmem:[#allocation3 + $0x16a] sm:$0xff]
  %v1049 = vld [vmem:[#allocation3 + $0x172] sm:$0xff]
  %v1050 = vmul.f32 %v1018, 0.2920817
  %v1051 = vmul.f32 %v1019, 0.2920817
  %v1052 = vmul.f32 %v1020, 0.2920817
  %v1053 = vmul.f32 %v1021, 0.2920817
  %v1054 = vmul.f32 %v1022, 0.2920817
  %v1055 = vmul.f32 %v1023, 0.2920817
  %v1056 = vmul.f32 %v1024, 0.2920817
  %v1057 = vmul.f32 %v1025, 0.2920817
  %v1058 = vmul.f32 %v1026, 0.2920817
  %v1059 = vmul.f32 %v1027, 0.2920817
  %v1060 = vmul.f32 %v1028, 0.2920817
  %v1061 = vmul.f32 %v1029, 0.2920817
  %v1062 = vmul.f32 %v1030, 0.2920817
  %v1063 = vmul.f32 %v1031, 0.2920817
  %v1064 = vmul.f32 %v1032, 0.2920817
  %v1065 = vmul.f32 %v1033, 0.2920817
  %v1066 = vmul.f32 %v1034, 0.2920817
  %v1067 = vmul.f32 %v1035, 0.2920817
  %v1068 = vmul.f32 %v1036, 0.2920817
  %v1069 = vmul.f32 %v1037, 0.2920817
  %v1070 = vmul.f32 %v1038, 0.2920817
  %v1071 = vmul.f32 %v1039, 0.2920817
  %v1072 = vmul.f32 %v1040, 0.2920817
  %v1073 = vmul.f32 %v1041, 0.2920817
  %v1074 = vmul.f32 %v1042, 0.2920817
  %v1075 = vmul.f32 %v1043, 0.2920817
  %v1076 = vmul.f32 %v1044, 0.2920817
  %v1077 = vmul.f32 %v1045, 0.2920817
  %v1078 = vmul.f32 %v1046, 0.2920817
  %v1079 = vmul.f32 %v1047, 0.2920817
  %v1080 = vmul.f32 %v1048, 0.2920817
  %v1081 = vmul.f32 %v1049, 0.2920817
  %v1082 = vadd.f32 %v986, %v1050
  %v1083 = vadd.f32 %v987, %v1051
  %v1084 = vadd.f32 %v988, %v1052
  %v1085 = vadd.f32 %v989, %v1053
  %v1086 = vadd.f32 %v990, %v1054
  %v1087 = vadd.f32 %v991, %v1055
  %v1088 = vadd.f32 %v992, %v1056
  %v1089 = vadd.f32 %v993, %v1057
  %v1090 = vadd.f32 %v994, %v1058
  %v1091 = vadd.f32 %v995, %v1059
  %v1092 = vadd.f32 %v996, %v1060
  %v1093 = vadd.f32 %v997, %v1061
  %v1094 = vadd.f32 %v998, %v1062
  %v1095 = vadd.f32 %v999, %v1063
  %v1096 = vadd.f32 %v1000, %v1064
  %v1097 = vadd.f32 %v1001, %v1065
  %v1098 = vadd.f32 %v1002, %v1066
  %v1099 = vadd.f32 %v1003, %v1067
  %v1100 = vadd.f32 %v1004, %v1068
  %v1101 = vadd.f32 %v1005, %v1069
  %v1102 = vadd.f32 %v1006, %v1070
  %v1103 = vadd.f32 %v1007, %v1071
  %v1104 = vadd.f32 %v1008, %v1072
  %v1105 = vadd.f32 %v1009, %v1073
  %v1106 = vadd.f32 %v1010, %v1074
  %v1107 = vadd.f32 %v1011, %v1075
  %v1108 = vadd.f32 %v1012, %v1076
  %v1109 = vadd.f32 %v1013, %v1077
  %v1110 = vadd.f32 %v1014, %v1078
  %v1111 = vadd.f32 %v1015, %v1079
  %v1112 = vadd.f32 %v1016, %v1080
  %v1113 = vadd.f32 %v1017, %v1081
  %v1114 = vld [vmem:[#allocation3 + $0x3] sm:$0xff]
  %v1115 = vld [vmem:[#allocation3 + $0xb] sm:$0xff]
  %v1116 = vld [vmem:[#allocation3 + $0x1b] sm:$0xff]
  %v1117 = vld [vmem:[#allocation3 + $0x23] sm:$0xff]
  %v1118 = vld [vmem:[#allocation3 + $0x33] sm:$0xff]
  %v1119 = vld [vmem:[#allocation3 + $0x3b] sm:$0xff]
  %v1120 = vld [vmem:[#allocation3 + $0x4b] sm:$0xff]
  %v1121 = vld [vmem:[#allocation3 + $0x53] sm:$0xff]
  %v1122 = vld [vmem:[#allocation3 + $0x63] sm:$0xff]
  %v1123 = vld [vmem:[#allocation3 + $0x6b] sm:$0xff]
  %v1124 = vld [vmem:[#allocation3 + $0x7b] sm:$0xff]
  %v1125 = vld [vmem:[#allocation3 + $0x83] sm:$0xff]
  %v1126 = vld [vmem:[#allocation3 + $0x93] sm:$0xff]
  %v1127 = vld [vmem:[#allocation3 + $0x9b] sm:$0xff]
  %v1128 = vld [vmem:[#allocation3 + $0xab] sm:$0xff]
  %v1129 = vld [vmem:[#allocation3 + $0xb3] sm:$0xff]
  %v1130 = vld [vmem:[#allocation3 + $0xc3] sm:$0xff]
  %v1131 = vld [vmem:[#allocation3 + $0xcb] sm:$0xff]
  %v1132 = vld [vmem:[#allocation3 + $0xdb] sm:$0xff]
  %v1133 = vld [vmem:[#allocation3 + $0xe3] sm:$0xff]
  %v1134 = vld [vmem:[#allocation3 + $0xf3] sm:$0xff]
  %v1135 = vld [vmem:[#allocation3 + $0xfb] sm:$0xff]
  %v1136 = vld [vmem:[#allocation3 + $0x10b] sm:$0xff]
  %v1137 = vld [vmem:[#allocation3 + $0x113] sm:$0xff]
  %v1138 = vld [vmem:[#allocation3 + $0x123] sm:$0xff]
  %v1139 = vld [vmem:[#allocation3 + $0x12b] sm:$0xff]
  %v1140 = vld [vmem:[#allocation3 + $0x13b] sm:$0xff]
  %v1141 = vld [vmem:[#allocation3 + $0x143] sm:$0xff]
  %v1142 = vld [vmem:[#allocation3 + $0x153] sm:$0xff]
  %v1143 = vld [vmem:[#allocation3 + $0x15b] sm:$0xff]
  %v1144 = vld [vmem:[#allocation3 + $0x16b] sm:$0xff]
  %v1145 = vld [vmem:[#allocation3 + $0x173] sm:$0xff]
  %v1146 = vmul.f32 %v1114, 0.23388076
  %v1147 = vmul.f32 %v1115, 0.23388076
  %v1148 = vmul.f32 %v1116, 0.23388076
  %v1149 = vmul.f32 %v1117, 0.23388076
  %v1150 = vmul.f32 %v1118, 0.23388076
  %v1151 = vmul.f32 %v1119, 0.23388076
  %v1152 = vmul.f32 %v1120, 0.23388076
  %v1153 = vmul.f32 %v1121, 0.23388076
  %v1154 = vmul.f32 %v1122, 0.23388076
  %v1155 = vmul.f32 %v1123, 0.23388076
  %v1156 = vmul.f32 %v1124, 0.23388076
  %v1157 = vmul.f32 %v1125, 0.23388076
  %v1158 = vmul.f32 %v1126, 0.23388076
  %v1159 = vmul.f32 %v1127, 0.23388076
  %v1160 = vmul.f32 %v1128, 0.23388076
  %v1161 = vmul.f32 %v1129, 0.23388076
  %v1162 = vmul.f32 %v1130, 0.23388076
  %v1163 = vmul.f32 %v1131, 0.23388076
  %v1164 = vmul.f32 %v1132, 0.23388076
  %v1165 = vmul.f32 %v1133, 0.23388076
  %v1166 = vmul.f32 %v1134, 0.23388076
  %v1167 = vmul.f32 %v1135, 0.23388076
  %v1168 = vmul.f32 %v1136, 0.23388076
  %v1169 = vmul.f32 %v1137, 0.23388076
  %v1170 = vmul.f32 %v1138, 0.23388076
  %v1171 = vmul.f32 %v1139, 0.23388076
  %v1172 = vmul.f32 %v1140, 0.23388076
  %v1173 = vmul.f32 %v1141, 0.23388076
  %v1174 = vmul.f32 %v1142, 0.23388076
  %v1175 = vmul.f32 %v1143, 0.23388076
  %v1176 = vmul.f32 %v1144, 0.23388076
  %v1177 = vmul.f32 %v1145, 0.23388076
  %v1178 = vadd.f32 %v1082, %v1146
  %v1179 = vadd.f32 %v1083, %v1147
  %v1180 = vadd.f32 %v1084, %v1148
  %v1181 = vadd.f32 %v1085, %v1149
  %v1182 = vadd.f32 %v1086, %v1150
  %v1183 = vadd.f32 %v1087, %v1151
  %v1184 = vadd.f32 %v1088, %v1152
  %v1185 = vadd.f32 %v1089, %v1153
  %v1186 = vadd.f32 %v1090, %v1154
  %v1187 = vadd.f32 %v1091, %v1155
  %v1188 = vadd.f32 %v1092, %v1156
  %v1189 = vadd.f32 %v1093, %v1157
  %v1190 = vadd.f32 %v1094, %v1158
  %v1191 = vadd.f32 %v1095, %v1159
  %v1192 = vadd.f32 %v1096, %v1160
  %v1193 = vadd.f32 %v1097, %v1161
  %v1194 = vadd.f32 %v1098, %v1162
  %v1195 = vadd.f32 %v1099, %v1163
  %v1196 = vadd.f32 %v1100, %v1164
  %v1197 = vadd.f32 %v1101, %v1165
  %v1198 = vadd.f32 %v1102, %v1166
  %v1199 = vadd.f32 %v1103, %v1167
  %v1200 = vadd.f32 %v1104, %v1168
  %v1201 = vadd.f32 %v1105, %v1169
  %v1202 = vadd.f32 %v1106, %v1170
  %v1203 = vadd.f32 %v1107, %v1171
  %v1204 = vadd.f32 %v1108, %v1172
  %v1205 = vadd.f32 %v1109, %v1173
  %v1206 = vadd.f32 %v1110, %v1174
  %v1207 = vadd.f32 %v1111, %v1175
  %v1208 = vadd.f32 %v1112, %v1176
  %v1209 = vadd.f32 %v1113, %v1177
  %v1210 = vld [vmem:[#allocation3 + $0x4] sm:$0xff]
  %v1211 = vld [vmem:[#allocation3 + $0xc] sm:$0xff]
  %v1212 = vld [vmem:[#allocation3 + $0x1c] sm:$0xff]
  %v1213 = vld [vmem:[#allocation3 + $0x24] sm:$0xff]
  %v1214 = vld [vmem:[#allocation3 + $0x34] sm:$0xff]
  %v1215 = vld [vmem:[#allocation3 + $0x3c] sm:$0xff]
  %v1216 = vld [vmem:[#allocation3 + $0x4c] sm:$0xff]
  %v1217 = vld [vmem:[#allocation3 + $0x54] sm:$0xff]
  %v1218 = vld [vmem:[#allocation3 + $0x64] sm:$0xff]
  %v1219 = vld [vmem:[#allocation3 + $0x6c] sm:$0xff]
  %v1220 = vld [vmem:[#allocation3 + $0x7c] sm:$0xff]
  %v1221 = vld [vmem:[#allocation3 + $0x84] sm:$0xff]
  %v1222 = vld [vmem:[#allocation3 + $0x94] sm:$0xff]
  %v1223 = vld [vmem:[#allocation3 + $0x9c] sm:$0xff]
  %v1224 = vld [vmem:[#allocation3 + $0xac] sm:$0xff]
  %v1225 = vld [vmem:[#allocation3 + $0xb4] sm:$0xff]
  %v1226 = vld [vmem:[#allocation3 + $0xc4] sm:$0xff]
  %v1227 = vld [vmem:[#allocation3 + $0xcc] sm:$0xff]
  %v1228 = vld [vmem:[#allocation3 + $0xdc] sm:$0xff]
  %v1229 = vld [vmem:[#allocation3 + $0xe4] sm:$0xff]
  %v1230 = vld [vmem:[#allocation3 + $0xf4] sm:$0xff]
  %v1231 = vld [vmem:[#allocation3 + $0xfc] sm:$0xff]
  %v1232 = vld [vmem:[#allocation3 + $0x10c] sm:$0xff]
  %v1233 = vld [vmem:[#allocation3 + $0x114] sm:$0xff]
  %v1234 = vld [vmem:[#allocation3 + $0x124] sm:$0xff]
  %v1235 = vld [vmem:[#allocation3 + $0x12c] sm:$0xff]
  %v1236 = vld [vmem:[#allocation3 + $0x13c] sm:$0xff]
  %v1237 = vld [vmem:[#allocation3 + $0x144] sm:$0xff]
  %v1238 = vld [vmem:[#allocation3 + $0x154] sm:$0xff]
  %v1239 = vld [vmem:[#allocation3 + $0x15c] sm:$0xff]
  %v1240 = vld [vmem:[#allocation3 + $0x16c] sm:$0xff]
  %v1241 = vld [vmem:[#allocation3 + $0x174] sm:$0xff]
  %v1242 = vmul.f32 %v1210, 0.120078385
  %v1243 = vmul.f32 %v1211, 0.120078385
  %v1244 = vmul.f32 %v1212, 0.120078385
  %v1245 = vmul.f32 %v1213, 0.120078385
  %v1246 = vmul.f32 %v1214, 0.120078385
  %v1247 = vmul.f32 %v1215, 0.120078385
  %v1248 = vmul.f32 %v1216, 0.120078385
  %v1249 = vmul.f32 %v1217, 0.120078385
  %v1250 = vmul.f32 %v1218, 0.120078385
  %v1251 = vmul.f32 %v1219, 0.120078385
  %v1252 = vmul.f32 %v1220, 0.120078385
  %v1253 = vmul.f32 %v1221, 0.120078385
  %v1254 = vmul.f32 %v1222, 0.120078385
  %v1255 = vmul.f32 %v1223, 0.120078385
  %v1256 = vmul.f32 %v1224, 0.120078385
  %v1257 = vmul.f32 %v1225, 0.120078385
  %v1258 = vmul.f32 %v1226, 0.120078385
  %v1259 = vmul.f32 %v1227, 0.120078385
  %v1260 = vmul.f32 %v1228, 0.120078385
  %v1261 = vmul.f32 %v1229, 0.120078385
  %v1262 = vmul.f32 %v1230, 0.120078385
  %v1263 = vmul.f32 %v1231, 0.120078385
  %v1264 = vmul.f32 %v1232, 0.120078385
  %v1265 = vmul.f32 %v1233, 0.120078385
  %v1266 = vmul.f32 %v1234, 0.120078385
  %v1267 = vmul.f32 %v1235, 0.120078385
  %v1268 = vmul.f32 %v1236, 0.120078385
  %v1269 = vmul.f32 %v1237, 0.120078385
  %v1270 = vmul.f32 %v1238, 0.120078385
  %v1271 = vmul.f32 %v1239, 0.120078385
  %v1272 = vmul.f32 %v1240, 0.120078385
  %v1273 = vmul.f32 %v1241, 0.120078385
  %v1274 = vadd.f32 %v1178, %v1242
  %v1275 = vadd.f32 %v1179, %v1243
  %v1276 = vadd.f32 %v1180, %v1244
  %v1277 = vadd.f32 %v1181, %v1245
  %v1278 = vadd.f32 %v1182, %v1246
  %v1279 = vadd.f32 %v1183, %v1247
  %v1280 = vadd.f32 %v1184, %v1248
  %v1281 = vadd.f32 %v1185, %v1249
  %v1282 = vadd.f32 %v1186, %v1250
  %v1283 = vadd.f32 %v1187, %v1251
  %v1284 = vadd.f32 %v1188, %v1252
  %v1285 = vadd.f32 %v1189, %v1253
  %v1286 = vadd.f32 %v1190, %v1254
  %v1287 = vadd.f32 %v1191, %v1255
  %v1288 = vadd.f32 %v1192, %v1256
  %v1289 = vadd.f32 %v1193, %v1257
  %v1290 = vadd.f32 %v1194, %v1258
  %v1291 = vadd.f32 %v1195, %v1259
  %v1292 = vadd.f32 %v1196, %v1260
  %v1293 = vadd.f32 %v1197, %v1261
  %v1294 = vadd.f32 %v1198, %v1262
  %v1295 = vadd.f32 %v1199, %v1263
  %v1296 = vadd.f32 %v1200, %v1264
  %v1297 = vadd.f32 %v1201, %v1265
  %v1298 = vadd.f32 %v1202, %v1266
  %v1299 = vadd.f32 %v1203, %v1267
  %v1300 = vadd.f32 %v1204, %v1268
  %v1301 = vadd.f32 %v1205, %v1269
  %v1302 = vadd.f32 %v1206, %v1270
  %v1303 = vadd.f32 %v1207, %v1271
  %v1304 = vadd.f32 %v1208, %v1272
  %v1305 = vadd.f32 %v1209, %v1273
  %1306 = vst.msk [vmem:[%s1] sm:$0xff] %vm8, %v1274
  %1307 = vst.msk [vmem:[%s1 + $0x8] sm:$0xff] %vm8, %v1275
  %1308 = vst.msk [vmem:[%s1 + $0x10] sm:$0xff] %vm8, %v1276
  %1309 = vst.msk [vmem:[%s1 + $0x18] sm:$0xff] %vm8, %v1277
  %1310 = vst.msk [vmem:[%s1 + $0x20] sm:$0xff] %vm8, %v1278
  %1311 = vst.msk [vmem:[%s1 + $0x28] sm:$0xff] %vm8, %v1279
  %1312 = vst.msk [vmem:[%s1 + $0x30] sm:$0xff] %vm8, %v1280
  %1313 = vst.msk [vmem:[%s1 + $0x38] sm:$0xff] %vm8, %v1281
  %1314 = vst.msk [vmem:[%s1 + $0x40] sm:$0xff] %vm8, %v1282
  %1315 = vst.msk [vmem:[%s1 + $0x48] sm:$0xff] %vm8, %v1283
  %1316 = vst.msk [vmem:[%s1 + $0x50] sm:$0xff] %vm8, %v1284
  %1317 = vst.msk [vmem:[%s1 + $0x58] sm:$0xff] %vm8, %v1285
  %1318 = vst.msk [vmem:[%s1 + $0x60] sm:$0xff] %vm8, %v1286
  %1319 = vst.msk [vmem:[%s1 + $0x68] sm:$0xff] %vm8, %v1287
  %1320 = vst.msk [vmem:[%s1 + $0x70] sm:$0xff] %vm8, %v1288
  %1321 = vst.msk [vmem:[%s1 + $0x78] sm:$0xff] %vm8, %v1289
  %1322 = vst.msk [vmem:[%s1 + $0x80] sm:$0xff] %vm8, %v1290
  %1323 = vst.msk [vmem:[%s1 + $0x88] sm:$0xff] %vm8, %v1291
  %1324 = vst.msk [vmem:[%s1 + $0x90] sm:$0xff] %vm8, %v1292
  %1325 = vst.msk [vmem:[%s1 + $0x98] sm:$0xff] %vm8, %v1293
  %1326 = vst.msk [vmem:[%s1 + $0xa0] sm:$0xff] %vm8, %v1294
  %1327 = vst.msk [vmem:[%s1 + $0xa8] sm:$0xff] %vm8, %v1295
  %1328 = vst.msk [vmem:[%s1 + $0xb0] sm:$0xff] %vm8, %v1296
  %1329 = vst.msk [vmem:[%s1 + $0xb8] sm:$0xff] %vm8, %v1297
  %1330 = vst.msk [vmem:[%s1 + $0xc0] sm:$0xff] %vm8, %v1298
  %1331 = vst.msk [vmem:[%s1 + $0xc8] sm:$0xff] %vm8, %v1299
  %1332 = vst.msk [vmem:[%s1 + $0xd0] sm:$0xff] %vm8, %v1300
  %1333 = vst.msk [vmem:[%s1 + $0xd8] sm:$0xff] %vm8, %v1301
  %1334 = vst.msk [vmem:[%s1 + $0xe0] sm:$0xff] %vm8, %v1302
  %1335 = vst.msk [vmem:[%s1 + $0xe8] sm:$0xff] %vm8, %v1303
  %1336 = vst.msk [vmem:[%s1 + $0xf0] sm:$0xff] %vm8, %v1304
  %1337 = vst.msk [vmem:[%s1 + $0xf8] sm:$0xff] %vm8, %v1305
  // Predicated region
  $region6: #{tpu_custom_call.1} parent=0 // pred_check
    _
  $region7: #{tpu_custom_call.1} parent=0 // pred_check_branch
    %1339 = sbr.rel (0) target = $region9
  $region8: #{tpu_custom_call.1} parent=0 // pred_region
    _
  $region9: #{tpu_custom_call.1} parent=0 // pred_fallthru
    _
  // Predicated region
  $region10: #{tpu_custom_call.1} parent=0 // pred_check
    _
  $region11: #{tpu_custom_call.1} parent=0 // pred_check_branch
    %1341 = sbr.rel (0) target = $region13
  $region12: #{tpu_custom_call.1} parent=0 // pred_region
    _
  $region13: #{tpu_custom_call.1} parent=0 // pred_fallthru
    _

</llo_original>
